<compile_context>
chip_gen: v6e
topology: v6e:2x2x1
jax: 0.10.0
libtpu: 0.0.40
codegen_flags: <defaults>
</compile_context>

<pallas_src>
import functools

import jax
import jax.numpy as jnp
from jax.experimental import pallas as pl
from jax.experimental.pallas import tpu as pltpu


# ------------------------------ helpers --------------------------------------
def _round_up(x, m):
    return -(-x // m) * m


def _sublane_multiple(itemsize):
    # Sub-32-bit dtypes pack along sublanes: native tiles are (8,128) f32,
    # (16,128) bf16, (32,128) int8/fp8.
    return {4: 8, 2: 16, 1: 32}.get(int(itemsize), 8)


def _pick_row_tile(packed_rows, lane_width, itemsize):
    """Pick the packed-row tile size.

    Prefer ~8 grid steps for large inputs (>=4 per v7x TensorCore so the
    BlockSpec pipeline can overlap DMA and compute), but never let a block
    drop below ~512 KiB (single-TC v5e/v6e lose more to small-block DMA than
    they gain), and never exceed ~2 MiB per block so double-buffered in+out
    pairs stay far under every generation's scoped-VMEM limit.
    """
    sub = _sublane_multiple(itemsize)
    bytes_per_row = lane_width * itemsize
    cap_rows = max(sub, ((2 * 1024 * 1024) // bytes_per_row // sub) * sub)
    min_rows = max(sub, (512 * 1024) // bytes_per_row)
    for k in (8, 4, 2):
        blk = pl.cdiv(packed_rows, k)
        if blk >= min_rows:
            return min(cap_rows, _round_up(blk, sub))
    return min(cap_rows, _round_up(packed_rows, sub))


def _layer_norm_ref(x, gamma, beta, eps):
    """Plain-JAX LayerNorm (torch.nn.LayerNorm semantics); also tiny-M path."""
    xf = x.astype(jnp.float32)
    mean = jnp.mean(xf, axis=-1, keepdims=True)
    var = jnp.mean(jnp.square(xf - mean), axis=-1, keepdims=True)
    y = (xf - mean) * jax.lax.rsqrt(var + eps) * gamma.astype(jnp.float32) \
        + beta.astype(jnp.float32)
    return y.astype(x.dtype)


# ----------------------------- Pallas kernel ---------------------------------
def _layer_norm_kernel(*refs, eps, d, p):
    """LayerNorm over groups of `d` lanes; `p` logical rows packed per vreg row.

    refs (p > 1):  x_ref (tm, p*d), gb_ref (2, p*d), seg_ref (p*d, p*d), o_ref
    refs (p == 1): x_ref (tm, d),   gb_ref (2, d),                       o_ref
    gb_ref row 0 = gamma (tiled p times, f32), row 1 = beta (tiled, f32).
    seg_ref is the block-diagonal 0/1 matrix (constant, DMA'd once).
    """
    if p > 1:
        x_ref, gb_ref, seg_ref, o_ref = refs
    else:
        x_ref, gb_ref, o_ref = refs

    x = x_ref[...].astype(jnp.float32)
    gamma = gb_ref[0:1, :]
    beta = gb_ref[1:2, :]
    inv_d = 1.0 / d

    if p > 1:
        seg = seg_ref[...]
        hi = jax.lax.Precision.HIGHEST
        # Segmented sum + broadcast in one shot on the (otherwise idle) MXU:
        # (v @ seg)[r, l] = sum of v[r, :] over the d-lane group containing
        # lane l, already broadcast across that group -> no cross-lane reshape.
        mean = jnp.dot(x, seg, precision=hi,
                       preferred_element_type=jnp.float32) * inv_d
        c = x - mean
        var = jnp.dot(c * c, seg, precision=hi,
                      preferred_element_type=jnp.float32) * inv_d
    else:
        # Feature axis already fills (or exceeds) the lanes: plain reductions.
        mean = jnp.sum(x, axis=-1, keepdims=True) * inv_d
        c = x - mean
        var = jnp.sum(c * c, axis=-1, keepdims=True) * inv_d

    a = jax.lax.rsqrt(var + eps) * gamma        # fold gamma into the inv-std
    o_ref[...] = (c * a + beta).astype(o_ref.dtype)


def layer_norm_pallas(x, gamma, beta, *, eps=1e-5, min_rows_for_pallas=64):
    """LayerNorm over the last dim of 2-D x via a lane-dense Pallas TPU kernel."""
    M, D = x.shape

    if M < min_rows_for_pallas:
        # Kernel launch + DMA setup dwarfs a couple KiB of work; let XLA fuse.
        return _layer_norm_ref(x, gamma, beta, eps)

    # Pack p logical LayerNorm rows per 128-lane vreg row when D divides 128,
    # so loads/stores use all lanes and stores are never masked partial vst.
    p = 128 // D if (D <= 128 and 128 % D == 0) else 1
    W = p * D

    pad_rows = (-M) % p                 # <= p-1 rows; only to legalize packing
    x_in = x if pad_rows == 0 else jnp.pad(x, ((0, pad_rows), (0, 0)))
    m_tot = M + pad_rows
    packed_rows = m_tot // p
    x2 = x_in.reshape(packed_rows, W)   # row-major reshape: layout plumbing only

    itemsize = jnp.dtype(x.dtype).itemsize
    tm = _pick_row_tile(packed_rows, W, itemsize)
    grid = pl.cdiv(packed_rows, tm)     # masked partial last block; no big pad

    # gamma/beta pre-cast to f32, single (2, W) constant block (DMA'd once).
    gb = jnp.stack([jnp.tile(gamma.astype(jnp.float32), p),
                    jnp.tile(beta.astype(jnp.float32), p)])

    in_specs = [pl.BlockSpec((tm, W), lambda i: (i, 0)),
                pl.BlockSpec((2, W), lambda i: (0, 0))]
    args = [x2, gb]
    if p > 1:
        # Block-diagonal 0/1 matrix, built once in the wrapper (64 KiB for
        # W=128 f32), shipped with a constant index_map -> resident in VMEM.
        li = jax.lax.broadcasted_iota(jnp.int32, (W, W), 0)
        lj = jax.lax.broadcasted_iota(jnp.int32, (W, W), 1)
        seg = (li // D == lj // D).astype(jnp.float32)
        in_specs.append(pl.BlockSpec((W, W), lambda i: (0, 0)))
        args.append(seg)

    kernel = functools.partial(_layer_norm_kernel, eps=float(eps), d=D, p=p)
    out = pl.pallas_call(
        kernel,
        out_shape=jax.ShapeDtypeStruct((packed_rows, W), x.dtype),
        grid_spec=pl.GridSpec(
            grid=(grid,),
            in_specs=in_specs,
            out_specs=pl.BlockSpec((tm, W), lambda i: (i, 0)),
        ),
        compiler_params=pltpu.CompilerParams(
            dimension_semantics=("parallel",),
            vmem_limit_bytes=32 * 1024 * 1024,
        ),
    )(*args)

    y = out.reshape(m_tot, D)
    return y if pad_rows == 0 else y[:M]


# ----------------------------- Module wrapper ---------------------------------
def make_lstm_layer_params(key, inputs_dim, outputs_dim, recurrent_N,
                           use_orthogonal=True):
    """Parameter init mirroring LSTMLayer.__init__.

    The LSTM weights are created (orthogonal/xavier init, zero bias) to mirror
    the PyTorch module's shapes, but they are NOT used in forward().
    """
    params = {}
    ortho = jax.nn.initializers.orthogonal()
    xavier = jax.nn.initializers.glorot_uniform()
    init = ortho if use_orthogonal else xavier
    keys = jax.random.split(key, 2 * recurrent_N)
    lstm = {}
    for layer in range(recurrent_N):
        in_dim = inputs_dim if layer == 0 else outputs_dim
        lstm[f"weight_ih_l{layer}"] = init(keys[2 * layer],
                                           (4 * outputs_dim, in_dim), jnp.float32)
        lstm[f"weight_hh_l{layer}"] = init(keys[2 * layer + 1],
                                           (4 * outputs_dim, outputs_dim), jnp.float32)
        lstm[f"bias_ih_l{layer}"] = jnp.zeros((4 * outputs_dim,), jnp.float32)
        lstm[f"bias_hh_l{layer}"] = jnp.zeros((4 * outputs_dim,), jnp.float32)
    params["rnn"] = lstm  # unused in forward (matches PyTorch module semantics)
    params["norm"] = {
        "gamma": jnp.ones((outputs_dim,), jnp.float32),
        "beta": jnp.zeros((outputs_dim,), jnp.float32),
    }
    return params


def lstm_layer_forward(params, x, hxs, masks):
    # forward: x = self.norm(x); return (x, hxs)   (masks is ignored)
    y = layer_norm_pallas(x, params["norm"]["gamma"], params["norm"]["beta"])
    return y, hxs


# --------------------------------- Main ---------------------------------------
if __name__ == "__main__":
    inputs_dim = 32
    outputs_dim = 32
    recurrent_N = 1

    key = jax.random.PRNGKey(0)
    k_param, k_x, k_h, k_c, k_x2, k_g, k_b = jax.random.split(key, 7)

    params = make_lstm_layer_params(k_param, inputs_dim, outputs_dim,
                                    recurrent_N, use_orthogonal=True)

    # --- Case 1: module-shaped small input (clean path: no pad, 1 grid step) --
    seq, n_envs = 8, 16
    batch = seq * n_envs                       # 128 rows
    # Non-zero common offset exercises the two-pass statistics.
    x = jax.random.normal(k_x, (batch, outputs_dim), jnp.float32) * 0.7 + 1.3
    hxs = (jax.random.normal(k_h, (batch, recurrent_N, outputs_dim), jnp.float32),
           jax.random.normal(k_c, (batch, recurrent_N, outputs_dim), jnp.float32))
    masks = jnp.ones((batch, 1), jnp.float32)

    y, hxs_out = lstm_layer_forward(params, x, hxs, masks)
    y = jax.block_until_ready(y)
    ref = _layer_norm_ref(x, params["norm"]["gamma"], params["norm"]["beta"], 1e-5)
    assert y.shape == x.shape
    assert jnp.allclose(y, ref, atol=1e-4, rtol=1e-4), "case1 mismatch vs reference"
    assert hxs_out[0] is hxs[0] and hxs_out[1] is hxs[1]

    # --- Case 2: larger input exercising p-pad, multi-step grid and the
    # masked partial last block, with non-trivial gamma/beta ------------------
    M2 = 8198                                   # %4 != 0 -> 2-row pad; grid=2
    x2 = jax.random.normal(k_x2, (M2, outputs_dim), jnp.float32) * 2.0 - 0.5
    gamma2 = 1.0 + 0.1 * jax.random.normal(k_g, (outputs_dim,), jnp.float32)
    beta2 = 0.1 * jax.random.normal(k_b, (outputs_dim,), jnp.float32)
    y2 = jax.block_until_ready(layer_norm_pallas(x2, gamma2, beta2))
    ref2 = _layer_norm_ref(x2, gamma2, beta2, 1e-5)
    assert y2.shape == x2.shape
    assert jnp.allclose(y2, ref2, atol=1e-4, rtol=1e-4), "case2 mismatch vs reference"

    print("KERNEL_OK")
</pallas_src>

<mosaic_0001>
module attributes {stable_mosaic.version = 11 : i64} {
  func.func @_layer_norm_kernel(%arg0: i32, %arg1: memref<32x128xf32, #tpu.memory_space<vmem>>, %arg2: memref<2x128xf32, #tpu.memory_space<vmem>>, %arg3: memref<128x128xf32, #tpu.memory_space<vmem>>, %arg4: memref<32x128xf32, #tpu.memory_space<vmem>>) attributes {dimension_semantics = [#tpu.dimension_semantics<parallel>], iteration_bounds = array<i64: 1>, scalar_prefetch = 0 : i64, scratch_operands = 0 : i64, tpu.core_type = #tpu.core_type<tc>, window_params = [{transform_indices = @transform_0, window_bounds = array<i64: 32, 128>}, {pipeline_mode = #tpu.pipeline_mode<synchronous>, transform_indices = @transform_1, window_bounds = array<i64: 2, 128>}, {pipeline_mode = #tpu.pipeline_mode<synchronous>, transform_indices = @transform_2, window_bounds = array<i64: 128, 128>}, {transform_indices = @transform_3, window_bounds = array<i64: 32, 128>}]} {
    %c0 = arith.constant 0 : index
    %c0_0 = arith.constant 0 : index
    %0 = vector.load %arg1[%c0, %c0_0] : memref<32x128xf32, #tpu.memory_space<vmem>>, vector<32x128xf32>
    %c0_1 = arith.constant 0 : index
    %c0_2 = arith.constant 0 : index
    %1 = vector.load %arg2[%c0_1, %c0_2] : memref<2x128xf32, #tpu.memory_space<vmem>>, vector<1x128xf32>
    %c1 = arith.constant 1 : index
    %c0_3 = arith.constant 0 : index
    %2 = vector.load %arg2[%c1, %c0_3] : memref<2x128xf32, #tpu.memory_space<vmem>>, vector<1x128xf32>
    %c0_4 = arith.constant 0 : index
    %c0_5 = arith.constant 0 : index
    %3 = vector.load %arg3[%c0_4, %c0_5] : memref<128x128xf32, #tpu.memory_space<vmem>>, vector<128x128xf32>
    %cst = arith.constant dense<0.000000e+00> : vector<32x128xf32>
    %4 = tpu.matmul %0, %3, %cst {dimension_numbers = #tpu.dot_dimension_numbers<[1], [0], [0], [1], [0, 0, 1, 1], [], []>, precision = #tpu.contract_precision<fp32>} : vector<32x128xf32>, vector<128x128xf32>, vector<32x128xf32> -> vector<32x128xf32>
    %cst_6 = arith.constant 3.125000e-02 : f32
    %5 = vector.broadcast %cst_6 : f32 to vector<32x128xf32>
    %6 = arith.mulf %4, %5 : vector<32x128xf32>
    %7 = arith.subf %0, %6 : vector<32x128xf32>
    %8 = arith.mulf %7, %7 : vector<32x128xf32>
    %cst_7 = arith.constant dense<0.000000e+00> : vector<32x128xf32>
    %9 = tpu.matmul %8, %3, %cst_7 {dimension_numbers = #tpu.dot_dimension_numbers<[1], [0], [0], [1], [0, 0, 1, 1], [], []>, precision = #tpu.contract_precision<fp32>} : vector<32x128xf32>, vector<128x128xf32>, vector<32x128xf32> -> vector<32x128xf32>
    %cst_8 = arith.constant 3.125000e-02 : f32
    %10 = vector.broadcast %cst_8 : f32 to vector<32x128xf32>
    %11 = arith.mulf %9, %10 : vector<32x128xf32>
    %cst_9 = arith.constant 9.99999974E-6 : f32
    %12 = vector.broadcast %cst_9 : f32 to vector<32x128xf32>
    %13 = arith.addf %11, %12 : vector<32x128xf32>
    %14 = math.rsqrt %13 : vector<32x128xf32>
    %15 = vector.broadcast %1 : vector<1x128xf32> to vector<32x128xf32>
    %16 = arith.mulf %14, %15 : vector<32x128xf32>
    %17 = arith.mulf %7, %16 : vector<32x128xf32>
    %18 = vector.broadcast %2 : vector<1x128xf32> to vector<32x128xf32>
    %19 = arith.addf %17, %18 : vector<32x128xf32>
    %c0_10 = arith.constant 0 : index
    %c0_11 = arith.constant 0 : index
    %20 = vector.load %arg4[%c0_10, %c0_11] : memref<32x128xf32, #tpu.memory_space<vmem>>, vector<32x128xf32>
    tpu.vector_store %arg4[%c0_10, %c0_11], %19 {strides = array<i32>} : memref<32x128xf32, #tpu.memory_space<vmem>>, vector<32x128xf32>,
    return
  }
  func.func @transform_0(%arg0: i32) -> (i32, i32) {
    %c0_i32 = arith.constant 0 : i32
    %c0_i32_0 = arith.constant 0 : i32
    return %arg0, %c0_i32 : i32, i32
  }
  func.func @transform_1(%arg0: i32) -> (i32, i32) {
    %c0_i32 = arith.constant 0 : i32
    %c0_i32_0 = arith.constant 0 : i32
    %c0_i32_1 = arith.constant 0 : i32
    return %c0_i32, %c0_i32_0 : i32, i32
  }
  func.func @transform_2(%arg0: i32) -> (i32, i32) {
    %c0_i32 = arith.constant 0 : i32
    %c0_i32_0 = arith.constant 0 : i32
    %c0_i32_1 = arith.constant 0 : i32
    return %c0_i32, %c0_i32_0 : i32, i32
  }
  func.func @transform_3(%arg0: i32) -> (i32, i32) {
    %c0_i32 = arith.constant 0 : i32
    %c0_i32_0 = arith.constant 0 : i32
    return %arg0, %c0_i32 : i32, i32
  }
}

</mosaic_0001>

<llo_original>
// kernel: tpu_custom_call.1
$region0: #{tpu_custom_call.1}
  #allocation0 [shape = 'u32[]', space=smem, size = 0x4, offset = 0x4, fixed_abs, tag = 'smem constant byte address 0x4 - core index']
  #allocation1 [shape = 'u32[144,128]{1,0:T(1,128)}', space=vmem, size = 0x12000, scoped, tag = 'internal scratch']
  %s0 = inlined_call_operand.hbm [shape: f32[32,128], index: 0, kind: input, shape index: {}]
  %s1 = inlined_call_operand.hbm [shape: f32[2,128], index: 1, kind: input, shape index: {}]
  %s2 = inlined_call_operand.hbm [shape: f32[128,128], index: 2, kind: input, shape index: {}]
  %s3 = inlined_call_operand.hbm [shape: f32[32,128], index: 3, kind: output, shape index: {}]
  %s4 = sld [smem:[#allocation0]]
  $region34: #{tpu_custom_call.1} parent=0
    _
  %s6 = ssub.s32 1, %s4
  %s7 = scalar_select 0, %s6, %s4
  $region1: #{tpu_custom_call.1} parent=0
    #allocation2 [shape = 'u8[16384]{0}', space=vmem, size = 0x4000, scoped, tag = 'input window, operand 0, single buffered']
    #allocation3 [shape = 's32[1]{0}', space=sflag, size = 0x4, scoped, tag = 'scoped memory for tpu_custom_call.1']
    #allocation4 [shape = 's32[1]{0}', space=sflag, size = 0x4, scoped, tag = 'scoped memory for tpu_custom_call.1']
    #allocation5 [shape = 'u8[1024]{0}', space=vmem, size = 0x400, scoped, tag = 'input window, operand 1, single buffered']
    #allocation6 [shape = 's32[1]{0}', space=sflag, size = 0x4, scoped, tag = 'scoped memory for tpu_custom_call.1']
    #allocation7 [shape = 'u8[65536]{0}', space=vmem, size = 0x10000, scoped, tag = 'input window, operand 2, single buffered']
    #allocation8 [shape = 'u8[16384]{0}', space=vmem, size = 0x4000, scoped, tag = 'output window, operand 0, single buffered']
    %8 = vsyncpa [#allocation3], 0
    %9 = vsyncpa [#allocation6], 0
    %10 = vsyncpa [#allocation4], 0
    // Predicated region
    $region2: #{tpu_custom_call.1} parent=1 // pred_check
      _
    $region3: #{tpu_custom_call.1} parent=1 // pred_check_branch
      %12 = sbr.rel (0) target = $region5
    $region4: #{tpu_custom_call.1} parent=1 // pred_region
      %s14 = ssub.s32 512, 512
      %15 = vsyncadd [#allocation3], %s14
      %s16 = sshll.u32 [#allocation2], 4
      %s17 = int_to_ptr.vmem [resolvable:$true] %s16
      %22 = dma.hbm_to_vmem [thread:$0]  %s0, 512, %s17, [#allocation3], 128, 128, 8
    $region5: #{tpu_custom_call.1} parent=1 // pred_fallthru
      _
    // Predicated region
    $region6: #{tpu_custom_call.1} parent=1 // pred_check
      _
    $region7: #{tpu_custom_call.1} parent=1 // pred_check_branch
      %24 = sbr.rel (0) target = $region9
    $region8: #{tpu_custom_call.1} parent=1 // pred_region
      %s26 = ssub.s32 32, 32
      %27 = vsyncadd [#allocation6], %s26
      %s29 = sshll.u32 [#allocation5], 4
      %s30 = int_to_ptr.vmem [resolvable:$true] %s29
      %32 = dma.hbm_to_vmem [thread:$0]  %s1, 32, %s30, [#allocation6]
    $region9: #{tpu_custom_call.1} parent=1 // pred_fallthru
      _
    // Predicated region
    $region10: #{tpu_custom_call.1} parent=1 // pred_check
      _
    $region11: #{tpu_custom_call.1} parent=1 // pred_check_branch
      %34 = sbr.rel (0) target = $region13
    $region12: #{tpu_custom_call.1} parent=1 // pred_region
      %s36 = ssub.s32 2048, 2048
      %37 = vsyncadd [#allocation6], %s36
      %s38 = sshll.u32 [#allocation7], 4
      %s39 = int_to_ptr.vmem [resolvable:$true] %s38
      %44 = dma.hbm_to_vmem [thread:$0]  %s2, 2048, %s39, [#allocation6], 128, 128, 8
    $region13: #{tpu_custom_call.1} parent=1 // pred_fallthru
      _
    // Predicated region
    $region14: #{tpu_custom_call.1} parent=1 // pred_check
      _
    $region15: #{tpu_custom_call.1} parent=1 // pred_check_branch
      %46 = sbr.rel (0) target = $region17
    $region16: #{tpu_custom_call.1} parent=1 // pred_region
      %47 = dma.done [#allocation3], 512
    $region17: #{tpu_custom_call.1} parent=1 // pred_fallthru
      _
    // Predicated region
    $region18: #{tpu_custom_call.1} parent=1 // pred_check
      _
    $region19: #{tpu_custom_call.1} parent=1 // pred_check_branch
      %49 = sbr.rel (0) target = $region21
    $region20: #{tpu_custom_call.1} parent=1 // pred_region
      %50 = dma.done [#allocation6], 32
    $region21: #{tpu_custom_call.1} parent=1 // pred_fallthru
      _
    // Predicated region
    $region22: #{tpu_custom_call.1} parent=1 // pred_check
      _
    $region23: #{tpu_custom_call.1} parent=1 // pred_check_branch
      %52 = sbr.rel (0) target = $region25
    $region24: #{tpu_custom_call.1} parent=1 // pred_region
      %53 = dma.done [#allocation6], 2048
    $region25: #{tpu_custom_call.1} parent=1 // pred_fallthru
      _
    %v54 = vld [vmem:[#allocation2] sm:$0xff]
    %v55 = vld [vmem:[#allocation2 + $0x8] sm:$0xff]
    %v56 = vld [vmem:[#allocation2 + $0x10] sm:$0xff]
    %v57 = vld [vmem:[#allocation2 + $0x18] sm:$0xff]
    %v58 = vld [vmem:[#allocation5] sm:$0x1]
    %v59 = vld [vmem:[#allocation5 + $0x1] sm:$0x1]
    %v60 = vld [vmem:[#allocation7] sm:$0xff]
    %v61 = vld [vmem:[#allocation7 + $0x8] sm:$0xff]
    %v62 = vld [vmem:[#allocation7 + $0x10] sm:$0xff]
    %v63 = vld [vmem:[#allocation7 + $0x18] sm:$0xff]
    %v64 = vld [vmem:[#allocation7 + $0x20] sm:$0xff]
    %v65 = vld [vmem:[#allocation7 + $0x28] sm:$0xff]
    %v66 = vld [vmem:[#allocation7 + $0x30] sm:$0xff]
    %v67 = vld [vmem:[#allocation7 + $0x38] sm:$0xff]
    %v68 = vld [vmem:[#allocation7 + $0x40] sm:$0xff]
    %v69 = vld [vmem:[#allocation7 + $0x48] sm:$0xff]
    %v70 = vld [vmem:[#allocation7 + $0x50] sm:$0xff]
    %v71 = vld [vmem:[#allocation7 + $0x58] sm:$0xff]
    %v72 = vld [vmem:[#allocation7 + $0x60] sm:$0xff]
    %v73 = vld [vmem:[#allocation7 + $0x68] sm:$0xff]
    %v74 = vld [vmem:[#allocation7 + $0x70] sm:$0xff]
    %v75 = vld [vmem:[#allocation7 + $0x78] sm:$0xff]
    %76 = vmatprep.subr.mxu0 0.0
    %v77 = vand.u32 %v75, 4294901760
    %78 = vmatpush1.msra.mxu0 %v77
    %79 = vmatprep.subr.mxu0 0.0
    %v80 = vand.u32 %v74, 4294901760
    %81 = vmatpush1.msra.mxu0 %v80
    %82 = vmatprep.subr.mxu0 0.0
    %v83 = vand.u32 %v73, 4294901760
    %84 = vmatpush1.msra.mxu0 %v83
    %85 = vmatprep.subr.mxu0 0.0
    %v86 = vand.u32 %v72, 4294901760
    %87 = vmatpush1.msra.mxu0 %v86
    %88 = vmatprep.subr.mxu0 0.0
    %v89 = vand.u32 %v71, 4294901760
    %90 = vmatpush1.msra.mxu0 %v89
    %91 = vmatprep.subr.mxu0 0.0
    %v92 = vand.u32 %v70, 4294901760
    %93 = vmatpush1.msra.mxu0 %v92
    %94 = vmatprep.subr.mxu0 0.0
    %v95 = vand.u32 %v69, 4294901760
    %96 = vmatpush1.msra.mxu0 %v95
    %97 = vmatprep.subr.mxu0 0.0
    %v98 = vand.u32 %v68, 4294901760
    %99 = vmatpush1.msra.mxu0 %v98
    %100 = vmatprep.subr.mxu0 0.0
    %v101 = vand.u32 %v67, 4294901760
    %102 = vmatpush1.msra.mxu0 %v101
    %103 = vmatprep.subr.mxu0 0.0
    %v104 = vand.u32 %v66, 4294901760
    %105 = vmatpush1.msra.mxu0 %v104
    %106 = vmatprep.subr.mxu0 0.0
    %v107 = vand.u32 %v65, 4294901760
    %108 = vmatpush1.msra.mxu0 %v107
    %109 = vmatprep.subr.mxu0 0.0
    %v110 = vand.u32 %v64, 4294901760
    %111 = vmatpush1.msra.mxu0 %v110
    %112 = vmatprep.subr.mxu0 0.0
    %v113 = vand.u32 %v63, 4294901760
    %114 = vmatpush1.msra.mxu0 %v113
    %115 = vmatprep.subr.mxu0 0.0
    %v116 = vand.u32 %v62, 4294901760
    %117 = vmatpush1.msra.mxu0 %v116
    %118 = vmatprep.subr.mxu0 0.0
    %v119 = vand.u32 %v61, 4294901760
    %120 = vmatpush1.msra.mxu0 %v119
    %121 = vmatprep.subr.mxu0 0.0
    %v122 = vand.u32 %v60, 4294901760
    %123 = vmatpush1.msra.mxu0 %v122
    %124 = vmatprep.subr.mxu0 0.0
    %125 = vmatpush2.msra.mxu0 0.0
    %126 = vmatprep.subr.mxu0 0.0
    %127 = vmatpush2.msra.mxu0 0.0
    %128 = vmatprep.subr.mxu0 0.0
    %129 = vmatpush2.msra.mxu0 0.0
    %130 = vmatprep.subr.mxu0 0.0
    %131 = vmatpush2.msra.mxu0 0.0
    %132 = vmatprep.subr.mxu0 0.0
    %133 = vmatpush2.msra.mxu0 0.0
    %134 = vmatprep.subr.mxu0 0.0
    %135 = vmatpush2.msra.mxu0 0.0
    %136 = vmatprep.subr.mxu0 0.0
    %137 = vmatpush2.msra.mxu0 0.0
    %138 = vmatprep.subr.mxu0 0.0
    %139 = vmatpush2.msra.mxu0 0.0
    %140 = vmatprep.subr.mxu0 0.0
    %141 = vmatpush2.msra.mxu0 0.0
    %142 = vmatprep.subr.mxu0 0.0
    %143 = vmatpush2.msra.mxu0 0.0
    %144 = vmatprep.subr.mxu0 0.0
    %145 = vmatpush2.msra.mxu0 0.0
    %146 = vmatprep.subr.mxu0 0.0
    %147 = vmatpush2.msra.mxu0 0.0
    %148 = vmatprep.subr.mxu0 0.0
    %149 = vmatpush2.msra.mxu0 0.0
    %150 = vmatprep.subr.mxu0 0.0
    %151 = vmatpush2.msra.mxu0 0.0
    %152 = vmatprep.subr.mxu0 0.0
    %153 = vmatpush2.msra.mxu0 0.0
    %154 = vmatprep.subr.mxu0 0.0
    %155 = vmatpush2.msra.mxu0 0.0
    %156 = vmatprep.mubr.f32.mxu0 0.0
    %v157 = vand.u32 %v54, 4294901760
    %v158 = vsub.f32 %v54, %v157
    %v159 = vand.u32 %v158, 4294901760
    %v160 = vsub.f32 %v158, %v159
    %v161 = vand.u32 %v160, 4294901760
    %162 = vmatmul.mubr.f32.gmra.mxu0 %v161
    %v163 = vpop.f32.mrf.mxu0
    %v164 = vadd.f32 0.0, %v163
    %v165 = vpop.f32.mrf.mxu0
    %166 = vmatprep.mubr.f32.mxu0 0.0
    %v167 = vand.u32 %v55, 4294901760
    %v168 = vsub.f32 %v55, %v167
    %v169 = vand.u32 %v168, 4294901760
    %v170 = vsub.f32 %v168, %v169
    %v171 = vand.u32 %v170, 4294901760
    %172 = vmatmul.mubr.f32.gmra.mxu0 %v171
    %v173 = vpop.f32.mrf.mxu0
    %v174 = vadd.f32 0.0, %v173
    %v175 = vpop.f32.mrf.mxu0
    %176 = vmatprep.mubr.f32.mxu0 0.0
    %v177 = vand.u32 %v56, 4294901760
    %v178 = vsub.f32 %v56, %v177
    %v179 = vand.u32 %v178, 4294901760
    %v180 = vsub.f32 %v178, %v179
    %v181 = vand.u32 %v180, 4294901760
    %182 = vmatmul.mubr.f32.gmra.mxu0 %v181
    %v183 = vpop.f32.mrf.mxu0
    %v184 = vadd.f32 0.0, %v183
    %v185 = vpop.f32.mrf.mxu0
    %186 = vmatprep.mubr.f32.mxu0 0.0
    %v187 = vand.u32 %v57, 4294901760
    %v188 = vsub.f32 %v57, %v187
    %v189 = vand.u32 %v188, 4294901760
    %v190 = vsub.f32 %v188, %v189
    %v191 = vand.u32 %v190, 4294901760
    %192 = vmatmul.mubr.f32.gmra.mxu0 %v191
    %v193 = vpop.f32.mrf.mxu0
    %v194 = vadd.f32 0.0, %v193
    %v195 = vpop.f32.mrf.mxu0
    %196 = vdwg.mxu0
    %197 = vmatprep.subr.mxu0 0.0
    %v198 = vand.u32 %v75, 4294901760
    %v199 = vsub.f32 %v75, %v198
    %v200 = vand.u32 %v199, 4294901760
    %v201 = vsub.f32 %v199, %v200
    %v202 = vand.u32 %v201, 4294901760
    %203 = vmatpush1.msra.mxu0 %v202
    %204 = vmatprep.subr.mxu0 0.0
    %v205 = vand.u32 %v74, 4294901760
    %v206 = vsub.f32 %v74, %v205
    %v207 = vand.u32 %v206, 4294901760
    %v208 = vsub.f32 %v206, %v207
    %v209 = vand.u32 %v208, 4294901760
    %210 = vmatpush1.msra.mxu0 %v209
    %211 = vmatprep.subr.mxu0 0.0
    %v212 = vand.u32 %v73, 4294901760
    %v213 = vsub.f32 %v73, %v212
    %v214 = vand.u32 %v213, 4294901760
    %v215 = vsub.f32 %v213, %v214
    %v216 = vand.u32 %v215, 4294901760
    %217 = vmatpush1.msra.mxu0 %v216
    %218 = vmatprep.subr.mxu0 0.0
    %v219 = vand.u32 %v72, 4294901760
    %v220 = vsub.f32 %v72, %v219
    %v221 = vand.u32 %v220, 4294901760
    %v222 = vsub.f32 %v220, %v221
    %v223 = vand.u32 %v222, 4294901760
    %224 = vmatpush1.msra.mxu0 %v223
    %225 = vmatprep.subr.mxu0 0.0
    %v226 = vand.u32 %v71, 4294901760
    %v227 = vsub.f32 %v71, %v226
    %v228 = vand.u32 %v227, 4294901760
    %v229 = vsub.f32 %v227, %v228
    %v230 = vand.u32 %v229, 4294901760
    %231 = vmatpush1.msra.mxu0 %v230
    %232 = vmatprep.subr.mxu0 0.0
    %v233 = vand.u32 %v70, 4294901760
    %v234 = vsub.f32 %v70, %v233
    %v235 = vand.u32 %v234, 4294901760
    %v236 = vsub.f32 %v234, %v235
    %v237 = vand.u32 %v236, 4294901760
    %238 = vmatpush1.msra.mxu0 %v237
    %239 = vmatprep.subr.mxu0 0.0
    %v240 = vand.u32 %v69, 4294901760
    %v241 = vsub.f32 %v69, %v240
    %v242 = vand.u32 %v241, 4294901760
    %v243 = vsub.f32 %v241, %v242
    %v244 = vand.u32 %v243, 4294901760
    %245 = vmatpush1.msra.mxu0 %v244
    %246 = vmatprep.subr.mxu0 0.0
    %v247 = vand.u32 %v68, 4294901760
    %v248 = vsub.f32 %v68, %v247
    %v249 = vand.u32 %v248, 4294901760
    %v250 = vsub.f32 %v248, %v249
    %v251 = vand.u32 %v250, 4294901760
    %252 = vmatpush1.msra.mxu0 %v251
    %253 = vmatprep.subr.mxu0 0.0
    %v254 = vand.u32 %v67, 4294901760
    %v255 = vsub.f32 %v67, %v254
    %v256 = vand.u32 %v255, 4294901760
    %v257 = vsub.f32 %v255, %v256
    %v258 = vand.u32 %v257, 4294901760
    %259 = vmatpush1.msra.mxu0 %v258
    %260 = vmatprep.subr.mxu0 0.0
    %v261 = vand.u32 %v66, 4294901760
    %v262 = vsub.f32 %v66, %v261
    %v263 = vand.u32 %v262, 4294901760
    %v264 = vsub.f32 %v262, %v263
    %v265 = vand.u32 %v264, 4294901760
    %266 = vmatpush1.msra.mxu0 %v265
    %267 = vmatprep.subr.mxu0 0.0
    %v268 = vand.u32 %v65, 4294901760
    %v269 = vsub.f32 %v65, %v268
    %v270 = vand.u32 %v269, 4294901760
    %v271 = vsub.f32 %v269, %v270
    %v272 = vand.u32 %v271, 4294901760
    %273 = vmatpush1.msra.mxu0 %v272
    %274 = vmatprep.subr.mxu0 0.0
    %v275 = vand.u32 %v64, 4294901760
    %v276 = vsub.f32 %v64, %v275
    %v277 = vand.u32 %v276, 4294901760
    %v278 = vsub.f32 %v276, %v277
    %v279 = vand.u32 %v278, 4294901760
    %280 = vmatpush1.msra.mxu0 %v279
    %281 = vmatprep.subr.mxu0 0.0
    %v282 = vand.u32 %v63, 4294901760
    %v283 = vsub.f32 %v63, %v282
    %v284 = vand.u32 %v283, 4294901760
    %v285 = vsub.f32 %v283, %v284
    %v286 = vand.u32 %v285, 4294901760
    %287 = vmatpush1.msra.mxu0 %v286
    %288 = vmatprep.subr.mxu0 0.0
    %v289 = vand.u32 %v62, 4294901760
    %v290 = vsub.f32 %v62, %v289
    %v291 = vand.u32 %v290, 4294901760
    %v292 = vsub.f32 %v290, %v291
    %v293 = vand.u32 %v292, 4294901760
    %294 = vmatpush1.msra.mxu0 %v293
    %295 = vmatprep.subr.mxu0 0.0
    %v296 = vand.u32 %v61, 4294901760
    %v297 = vsub.f32 %v61, %v296
    %v298 = vand.u32 %v297, 4294901760
    %v299 = vsub.f32 %v297, %v298
    %v300 = vand.u32 %v299, 4294901760
    %301 = vmatpush1.msra.mxu0 %v300
    %302 = vmatprep.subr.mxu0 0.0
    %v303 = vand.u32 %v60, 4294901760
    %v304 = vsub.f32 %v60, %v303
    %v305 = vand.u32 %v304, 4294901760
    %v306 = vsub.f32 %v304, %v305
    %v307 = vand.u32 %v306, 4294901760
    %308 = vmatpush1.msra.mxu0 %v307
    %309 = vmatprep.subr.mxu0 0.0
    %310 = vmatpush2.msra.mxu0 0.0
    %311 = vmatprep.subr.mxu0 0.0
    %312 = vmatpush2.msra.mxu0 0.0
    %313 = vmatprep.subr.mxu0 0.0
    %314 = vmatpush2.msra.mxu0 0.0
    %315 = vmatprep.subr.mxu0 0.0
    %316 = vmatpush2.msra.mxu0 0.0
    %317 = vmatprep.subr.mxu0 0.0
    %318 = vmatpush2.msra.mxu0 0.0
    %319 = vmatprep.subr.mxu0 0.0
    %320 = vmatpush2.msra.mxu0 0.0
    %321 = vmatprep.subr.mxu0 0.0
    %322 = vmatpush2.msra.mxu0 0.0
    %323 = vmatprep.subr.mxu0 0.0
    %324 = vmatpush2.msra.mxu0 0.0
    %325 = vmatprep.subr.mxu0 0.0
    %326 = vmatpush2.msra.mxu0 0.0
    %327 = vmatprep.subr.mxu0 0.0
    %328 = vmatpush2.msra.mxu0 0.0
    %329 = vmatprep.subr.mxu0 0.0
    %330 = vmatpush2.msra.mxu0 0.0
    %331 = vmatprep.subr.mxu0 0.0
    %332 = vmatpush2.msra.mxu0 0.0
    %333 = vmatprep.subr.mxu0 0.0
    %334 = vmatpush2.msra.mxu0 0.0
    %335 = vmatprep.subr.mxu0 0.0
    %336 = vmatpush2.msra.mxu0 0.0
    %337 = vmatprep.subr.mxu0 0.0
    %338 = vmatpush2.msra.mxu0 0.0
    %339 = vmatprep.subr.mxu0 0.0
    %340 = vmatpush2.msra.mxu0 0.0
    %341 = vmatprep.mubr.f32.mxu0 0.0
    %v342 = vand.u32 %v54, 4294901760
    %343 = vmatmul.mubr.f32.gmra.mxu0 %v342
    %v344 = vpop.f32.mrf.mxu0
    %v345 = vadd.f32 %v164, %v344
    %v346 = vpop.f32.mrf.mxu0
    %347 = vmatprep.mubr.f32.mxu0 0.0
    %v348 = vand.u32 %v55, 4294901760
    %349 = vmatmul.mubr.f32.gmra.mxu0 %v348
    %v350 = vpop.f32.mrf.mxu0
    %v351 = vadd.f32 %v174, %v350
    %v352 = vpop.f32.mrf.mxu0
    %353 = vmatprep.mubr.f32.mxu0 0.0
    %v354 = vand.u32 %v56, 4294901760
    %355 = vmatmul.mubr.f32.gmra.mxu0 %v354
    %v356 = vpop.f32.mrf.mxu0
    %v357 = vadd.f32 %v184, %v356
    %v358 = vpop.f32.mrf.mxu0
    %359 = vmatprep.mubr.f32.mxu0 0.0
    %v360 = vand.u32 %v57, 4294901760
    %361 = vmatmul.mubr.f32.gmra.mxu0 %v360
    %v362 = vpop.f32.mrf.mxu0
    %v363 = vadd.f32 %v194, %v362
    %v364 = vpop.f32.mrf.mxu0
    %365 = vdwg.mxu0
    %366 = vmatprep.subr.mxu0 0.0
    %v367 = vand.u32 %v75, 4294901760
    %v368 = vsub.f32 %v75, %v367
    %369 = vmatpush1.msra.mxu0 %v368
    %370 = vmatprep.subr.mxu0 0.0
    %v371 = vand.u32 %v74, 4294901760
    %v372 = vsub.f32 %v74, %v371
    %373 = vmatpush1.msra.mxu0 %v372
    %374 = vmatprep.subr.mxu0 0.0
    %v375 = vand.u32 %v73, 4294901760
    %v376 = vsub.f32 %v73, %v375
    %377 = vmatpush1.msra.mxu0 %v376
    %378 = vmatprep.subr.mxu0 0.0
    %v379 = vand.u32 %v72, 4294901760
    %v380 = vsub.f32 %v72, %v379
    %381 = vmatpush1.msra.mxu0 %v380
    %382 = vmatprep.subr.mxu0 0.0
    %v383 = vand.u32 %v71, 4294901760
    %v384 = vsub.f32 %v71, %v383
    %385 = vmatpush1.msra.mxu0 %v384
    %386 = vmatprep.subr.mxu0 0.0
    %v387 = vand.u32 %v70, 4294901760
    %v388 = vsub.f32 %v70, %v387
    %389 = vmatpush1.msra.mxu0 %v388
    %390 = vmatprep.subr.mxu0 0.0
    %v391 = vand.u32 %v69, 4294901760
    %v392 = vsub.f32 %v69, %v391
    %393 = vmatpush1.msra.mxu0 %v392
    %394 = vmatprep.subr.mxu0 0.0
    %v395 = vand.u32 %v68, 4294901760
    %v396 = vsub.f32 %v68, %v395
    %397 = vmatpush1.msra.mxu0 %v396
    %398 = vmatprep.subr.mxu0 0.0
    %v399 = vand.u32 %v67, 4294901760
    %v400 = vsub.f32 %v67, %v399
    %401 = vmatpush1.msra.mxu0 %v400
    %402 = vmatprep.subr.mxu0 0.0
    %v403 = vand.u32 %v66, 4294901760
    %v404 = vsub.f32 %v66, %v403
    %405 = vmatpush1.msra.mxu0 %v404
    %406 = vmatprep.subr.mxu0 0.0
    %v407 = vand.u32 %v65, 4294901760
    %v408 = vsub.f32 %v65, %v407
    %409 = vmatpush1.msra.mxu0 %v408
    %410 = vmatprep.subr.mxu0 0.0
    %v411 = vand.u32 %v64, 4294901760
    %v412 = vsub.f32 %v64, %v411
    %413 = vmatpush1.msra.mxu0 %v412
    %414 = vmatprep.subr.mxu0 0.0
    %v415 = vand.u32 %v63, 4294901760
    %v416 = vsub.f32 %v63, %v415
    %417 = vmatpush1.msra.mxu0 %v416
    %418 = vmatprep.subr.mxu0 0.0
    %v419 = vand.u32 %v62, 4294901760
    %v420 = vsub.f32 %v62, %v419
    %421 = vmatpush1.msra.mxu0 %v420
    %422 = vmatprep.subr.mxu0 0.0
    %v423 = vand.u32 %v61, 4294901760
    %v424 = vsub.f32 %v61, %v423
    %425 = vmatpush1.msra.mxu0 %v424
    %426 = vmatprep.subr.mxu0 0.0
    %v427 = vand.u32 %v60, 4294901760
    %v428 = vsub.f32 %v60, %v427
    %429 = vmatpush1.msra.mxu0 %v428
    %430 = vmatprep.subr.mxu0 0.0
    %431 = vmatpush2.msra.mxu0 0.0
    %432 = vmatprep.subr.mxu0 0.0
    %433 = vmatpush2.msra.mxu0 0.0
    %434 = vmatprep.subr.mxu0 0.0
    %435 = vmatpush2.msra.mxu0 0.0
    %436 = vmatprep.subr.mxu0 0.0
    %437 = vmatpush2.msra.mxu0 0.0
    %438 = vmatprep.subr.mxu0 0.0
    %439 = vmatpush2.msra.mxu0 0.0
    %440 = vmatprep.subr.mxu0 0.0
    %441 = vmatpush2.msra.mxu0 0.0
    %442 = vmatprep.subr.mxu0 0.0
    %443 = vmatpush2.msra.mxu0 0.0
    %444 = vmatprep.subr.mxu0 0.0
    %445 = vmatpush2.msra.mxu0 0.0
    %446 = vmatprep.subr.mxu0 0.0
    %447 = vmatpush2.msra.mxu0 0.0
    %448 = vmatprep.subr.mxu0 0.0
    %449 = vmatpush2.msra.mxu0 0.0
    %450 = vmatprep.subr.mxu0 0.0
    %451 = vmatpush2.msra.mxu0 0.0
    %452 = vmatprep.subr.mxu0 0.0
    %453 = vmatpush2.msra.mxu0 0.0
    %454 = vmatprep.subr.mxu0 0.0
    %455 = vmatpush2.msra.mxu0 0.0
    %456 = vmatprep.subr.mxu0 0.0
    %457 = vmatpush2.msra.mxu0 0.0
    %458 = vmatprep.subr.mxu0 0.0
    %459 = vmatpush2.msra.mxu0 0.0
    %460 = vmatprep.subr.mxu0 0.0
    %461 = vmatpush2.msra.mxu0 0.0
    %462 = vmatprep.mubr.f32.mxu0 0.0
    %v463 = vand.u32 %v54, 4294901760
    %v464 = vsub.f32 %v54, %v463
    %465 = vmatmul.mubr.f32.gmra.mxu0 %v464
    %v466 = vpop.f32.mrf.mxu0
    %v467 = vadd.f32 %v345, %v466
    %v468 = vpop.f32.mrf.mxu0
    %469 = vmatprep.mubr.f32.mxu0 0.0
    %v470 = vand.u32 %v55, 4294901760
    %v471 = vsub.f32 %v55, %v470
    %472 = vmatmul.mubr.f32.gmra.mxu0 %v471
    %v473 = vpop.f32.mrf.mxu0
    %v474 = vadd.f32 %v351, %v473
    %v475 = vpop.f32.mrf.mxu0
    %476 = vmatprep.mubr.f32.mxu0 0.0
    %v477 = vand.u32 %v56, 4294901760
    %v478 = vsub.f32 %v56, %v477
    %479 = vmatmul.mubr.f32.gmra.mxu0 %v478
    %v480 = vpop.f32.mrf.mxu0
    %v481 = vadd.f32 %v357, %v480
    %v482 = vpop.f32.mrf.mxu0
    %483 = vmatprep.mubr.f32.mxu0 0.0
    %v484 = vand.u32 %v57, 4294901760
    %v485 = vsub.f32 %v57, %v484
    %486 = vmatmul.mubr.f32.gmra.mxu0 %v485
    %v487 = vpop.f32.mrf.mxu0
    %v488 = vadd.f32 %v363, %v487
    %v489 = vpop.f32.mrf.mxu0
    %490 = vdwg.mxu0
    %491 = vmatprep.subr.mxu0 0.0
    %v492 = vand.u32 %v75, 4294901760
    %493 = vmatpush1.msra.mxu0 %v492
    %494 = vmatprep.subr.mxu0 0.0
    %v495 = vand.u32 %v74, 4294901760
    %496 = vmatpush1.msra.mxu0 %v495
    %497 = vmatprep.subr.mxu0 0.0
    %v498 = vand.u32 %v73, 4294901760
    %499 = vmatpush1.msra.mxu0 %v498
    %500 = vmatprep.subr.mxu0 0.0
    %v501 = vand.u32 %v72, 4294901760
    %502 = vmatpush1.msra.mxu0 %v501
    %503 = vmatprep.subr.mxu0 0.0
    %v504 = vand.u32 %v71, 4294901760
    %505 = vmatpush1.msra.mxu0 %v504
    %506 = vmatprep.subr.mxu0 0.0
    %v507 = vand.u32 %v70, 4294901760
    %508 = vmatpush1.msra.mxu0 %v507
    %509 = vmatprep.subr.mxu0 0.0
    %v510 = vand.u32 %v69, 4294901760
    %511 = vmatpush1.msra.mxu0 %v510
    %512 = vmatprep.subr.mxu0 0.0
    %v513 = vand.u32 %v68, 4294901760
    %514 = vmatpush1.msra.mxu0 %v513
    %515 = vmatprep.subr.mxu0 0.0
    %v516 = vand.u32 %v67, 4294901760
    %517 = vmatpush1.msra.mxu0 %v516
    %518 = vmatprep.subr.mxu0 0.0
    %v519 = vand.u32 %v66, 4294901760
    %520 = vmatpush1.msra.mxu0 %v519
    %521 = vmatprep.subr.mxu0 0.0
    %v522 = vand.u32 %v65, 4294901760
    %523 = vmatpush1.msra.mxu0 %v522
    %524 = vmatprep.subr.mxu0 0.0
    %v525 = vand.u32 %v64, 4294901760
    %526 = vmatpush1.msra.mxu0 %v525
    %527 = vmatprep.subr.mxu0 0.0
    %v528 = vand.u32 %v63, 4294901760
    %529 = vmatpush1.msra.mxu0 %v528
    %530 = vmatprep.subr.mxu0 0.0
    %v531 = vand.u32 %v62, 4294901760
    %532 = vmatpush1.msra.mxu0 %v531
    %533 = vmatprep.subr.mxu0 0.0
    %v534 = vand.u32 %v61, 4294901760
    %535 = vmatpush1.msra.mxu0 %v534
    %536 = vmatprep.subr.mxu0 0.0
    %v537 = vand.u32 %v60, 4294901760
    %538 = vmatpush1.msra.mxu0 %v537
    %539 = vmatprep.subr.mxu0 0.0
    %540 = vmatpush2.msra.mxu0 0.0
    %541 = vmatprep.subr.mxu0 0.0
    %542 = vmatpush2.msra.mxu0 0.0
    %543 = vmatprep.subr.mxu0 0.0
    %544 = vmatpush2.msra.mxu0 0.0
    %545 = vmatprep.subr.mxu0 0.0
    %546 = vmatpush2.msra.mxu0 0.0
    %547 = vmatprep.subr.mxu0 0.0
    %548 = vmatpush2.msra.mxu0 0.0
    %549 = vmatprep.subr.mxu0 0.0
    %550 = vmatpush2.msra.mxu0 0.0
    %551 = vmatprep.subr.mxu0 0.0
    %552 = vmatpush2.msra.mxu0 0.0
    %553 = vmatprep.subr.mxu0 0.0
    %554 = vmatpush2.msra.mxu0 0.0
    %555 = vmatprep.subr.mxu0 0.0
    %556 = vmatpush2.msra.mxu0 0.0
    %557 = vmatprep.subr.mxu0 0.0
    %558 = vmatpush2.msra.mxu0 0.0
    %559 = vmatprep.subr.mxu0 0.0
    %560 = vmatpush2.msra.mxu0 0.0
    %561 = vmatprep.subr.mxu0 0.0
    %562 = vmatpush2.msra.mxu0 0.0
    %563 = vmatprep.subr.mxu0 0.0
    %564 = vmatpush2.msra.mxu0 0.0
    %565 = vmatprep.subr.mxu0 0.0
    %566 = vmatpush2.msra.mxu0 0.0
    %567 = vmatprep.subr.mxu0 0.0
    %568 = vmatpush2.msra.mxu0 0.0
    %569 = vmatprep.subr.mxu0 0.0
    %570 = vmatpush2.msra.mxu0 0.0
    %571 = vmatprep.mubr.f32.mxu0 0.0
    %v572 = vand.u32 %v54, 4294901760
    %v573 = vsub.f32 %v54, %v572
    %v574 = vand.u32 %v573, 4294901760
    %575 = vmatmul.mubr.f32.gmra.mxu0 %v574
    %v576 = vpop.f32.mrf.mxu0
    %v577 = vadd.f32 %v467, %v576
    %v578 = vpop.f32.mrf.mxu0
    %579 = vmatprep.mubr.f32.mxu0 0.0
    %v580 = vand.u32 %v55, 4294901760
    %v581 = vsub.f32 %v55, %v580
    %v582 = vand.u32 %v581, 4294901760
    %583 = vmatmul.mubr.f32.gmra.mxu0 %v582
    %v584 = vpop.f32.mrf.mxu0
    %v585 = vadd.f32 %v474, %v584
    %v586 = vpop.f32.mrf.mxu0
    %587 = vmatprep.mubr.f32.mxu0 0.0
    %v588 = vand.u32 %v56, 4294901760
    %v589 = vsub.f32 %v56, %v588
    %v590 = vand.u32 %v589, 4294901760
    %591 = vmatmul.mubr.f32.gmra.mxu0 %v590
    %v592 = vpop.f32.mrf.mxu0
    %v593 = vadd.f32 %v481, %v592
    %v594 = vpop.f32.mrf.mxu0
    %595 = vmatprep.mubr.f32.mxu0 0.0
    %v596 = vand.u32 %v57, 4294901760
    %v597 = vsub.f32 %v57, %v596
    %v598 = vand.u32 %v597, 4294901760
    %599 = vmatmul.mubr.f32.gmra.mxu0 %v598
    %v600 = vpop.f32.mrf.mxu0
    %v601 = vadd.f32 %v488, %v600
    %v602 = vpop.f32.mrf.mxu0
    %603 = vdwg.mxu0
    %604 = vmatprep.subr.mxu0 0.0
    %v605 = vand.u32 %v75, 4294901760
    %v606 = vsub.f32 %v75, %v605
    %v607 = vand.u32 %v606, 4294901760
    %608 = vmatpush1.msra.mxu0 %v607
    %609 = vmatprep.subr.mxu0 0.0
    %v610 = vand.u32 %v74, 4294901760
    %v611 = vsub.f32 %v74, %v610
    %v612 = vand.u32 %v611, 4294901760
    %613 = vmatpush1.msra.mxu0 %v612
    %614 = vmatprep.subr.mxu0 0.0
    %v615 = vand.u32 %v73, 4294901760
    %v616 = vsub.f32 %v73, %v615
    %v617 = vand.u32 %v616, 4294901760
    %618 = vmatpush1.msra.mxu0 %v617
    %619 = vmatprep.subr.mxu0 0.0
    %v620 = vand.u32 %v72, 4294901760
    %v621 = vsub.f32 %v72, %v620
    %v622 = vand.u32 %v621, 4294901760
    %623 = vmatpush1.msra.mxu0 %v622
    %624 = vmatprep.subr.mxu0 0.0
    %v625 = vand.u32 %v71, 4294901760
    %v626 = vsub.f32 %v71, %v625
    %v627 = vand.u32 %v626, 4294901760
    %628 = vmatpush1.msra.mxu0 %v627
    %629 = vmatprep.subr.mxu0 0.0
    %v630 = vand.u32 %v70, 4294901760
    %v631 = vsub.f32 %v70, %v630
    %v632 = vand.u32 %v631, 4294901760
    %633 = vmatpush1.msra.mxu0 %v632
    %634 = vmatprep.subr.mxu0 0.0
    %v635 = vand.u32 %v69, 4294901760
    %v636 = vsub.f32 %v69, %v635
    %v637 = vand.u32 %v636, 4294901760
    %638 = vmatpush1.msra.mxu0 %v637
    %639 = vmatprep.subr.mxu0 0.0
    %v640 = vand.u32 %v68, 4294901760
    %v641 = vsub.f32 %v68, %v640
    %v642 = vand.u32 %v641, 4294901760
    %643 = vmatpush1.msra.mxu0 %v642
    %644 = vmatprep.subr.mxu0 0.0
    %v645 = vand.u32 %v67, 4294901760
    %v646 = vsub.f32 %v67, %v645
    %v647 = vand.u32 %v646, 4294901760
    %648 = vmatpush1.msra.mxu0 %v647
    %649 = vmatprep.subr.mxu0 0.0
    %v650 = vand.u32 %v66, 4294901760
    %v651 = vsub.f32 %v66, %v650
    %v652 = vand.u32 %v651, 4294901760
    %653 = vmatpush1.msra.mxu0 %v652
    %654 = vmatprep.subr.mxu0 0.0
    %v655 = vand.u32 %v65, 4294901760
    %v656 = vsub.f32 %v65, %v655
    %v657 = vand.u32 %v656, 4294901760
    %658 = vmatpush1.msra.mxu0 %v657
    %659 = vmatprep.subr.mxu0 0.0
    %v660 = vand.u32 %v64, 4294901760
    %v661 = vsub.f32 %v64, %v660
    %v662 = vand.u32 %v661, 4294901760
    %663 = vmatpush1.msra.mxu0 %v662
    %664 = vmatprep.subr.mxu0 0.0
    %v665 = vand.u32 %v63, 4294901760
    %v666 = vsub.f32 %v63, %v665
    %v667 = vand.u32 %v666, 4294901760
    %668 = vmatpush1.msra.mxu0 %v667
    %669 = vmatprep.subr.mxu0 0.0
    %v670 = vand.u32 %v62, 4294901760
    %v671 = vsub.f32 %v62, %v670
    %v672 = vand.u32 %v671, 4294901760
    %673 = vmatpush1.msra.mxu0 %v672
    %674 = vmatprep.subr.mxu0 0.0
    %v675 = vand.u32 %v61, 4294901760
    %v676 = vsub.f32 %v61, %v675
    %v677 = vand.u32 %v676, 4294901760
    %678 = vmatpush1.msra.mxu0 %v677
    %679 = vmatprep.subr.mxu0 0.0
    %v680 = vand.u32 %v60, 4294901760
    %v681 = vsub.f32 %v60, %v680
    %v682 = vand.u32 %v681, 4294901760
    %683 = vmatpush1.msra.mxu0 %v682
    %684 = vmatprep.subr.mxu0 0.0
    %685 = vmatpush2.msra.mxu0 0.0
    %686 = vmatprep.subr.mxu0 0.0
    %687 = vmatpush2.msra.mxu0 0.0
    %688 = vmatprep.subr.mxu0 0.0
    %689 = vmatpush2.msra.mxu0 0.0
    %690 = vmatprep.subr.mxu0 0.0
    %691 = vmatpush2.msra.mxu0 0.0
    %692 = vmatprep.subr.mxu0 0.0
    %693 = vmatpush2.msra.mxu0 0.0
    %694 = vmatprep.subr.mxu0 0.0
    %695 = vmatpush2.msra.mxu0 0.0
    %696 = vmatprep.subr.mxu0 0.0
    %697 = vmatpush2.msra.mxu0 0.0
    %698 = vmatprep.subr.mxu0 0.0
    %699 = vmatpush2.msra.mxu0 0.0
    %700 = vmatprep.subr.mxu0 0.0
    %701 = vmatpush2.msra.mxu0 0.0
    %702 = vmatprep.subr.mxu0 0.0
    %703 = vmatpush2.msra.mxu0 0.0
    %704 = vmatprep.subr.mxu0 0.0
    %705 = vmatpush2.msra.mxu0 0.0
    %706 = vmatprep.subr.mxu0 0.0
    %707 = vmatpush2.msra.mxu0 0.0
    %708 = vmatprep.subr.mxu0 0.0
    %709 = vmatpush2.msra.mxu0 0.0
    %710 = vmatprep.subr.mxu0 0.0
    %711 = vmatpush2.msra.mxu0 0.0
    %712 = vmatprep.subr.mxu0 0.0
    %713 = vmatpush2.msra.mxu0 0.0
    %714 = vmatprep.subr.mxu0 0.0
    %715 = vmatpush2.msra.mxu0 0.0
    %716 = vmatprep.mubr.f32.mxu0 0.0
    %v717 = vand.u32 %v54, 4294901760
    %718 = vmatmul.mubr.f32.gmra.mxu0 %v717
    %v719 = vpop.f32.mrf.mxu0
    %v720 = vadd.f32 %v577, %v719
    %v721 = vpop.f32.mrf.mxu0
    %722 = vmatprep.mubr.f32.mxu0 0.0
    %v723 = vand.u32 %v55, 4294901760
    %724 = vmatmul.mubr.f32.gmra.mxu0 %v723
    %v725 = vpop.f32.mrf.mxu0
    %v726 = vadd.f32 %v585, %v725
    %v727 = vpop.f32.mrf.mxu0
    %728 = vmatprep.mubr.f32.mxu0 0.0
    %v729 = vand.u32 %v56, 4294901760
    %730 = vmatmul.mubr.f32.gmra.mxu0 %v729
    %v731 = vpop.f32.mrf.mxu0
    %v732 = vadd.f32 %v593, %v731
    %v733 = vpop.f32.mrf.mxu0
    %734 = vmatprep.mubr.f32.mxu0 0.0
    %v735 = vand.u32 %v57, 4294901760
    %736 = vmatmul.mubr.f32.gmra.mxu0 %v735
    %v737 = vpop.f32.mrf.mxu0
    %v738 = vadd.f32 %v601, %v737
    %v739 = vpop.f32.mrf.mxu0
    %740 = vdwg.mxu0
    %741 = vmatprep.subr.mxu0 0.0
    %v742 = vand.u32 %v75, 4294901760
    %743 = vmatpush1.msra.mxu0 %v742
    %744 = vmatprep.subr.mxu0 0.0
    %v745 = vand.u32 %v74, 4294901760
    %746 = vmatpush1.msra.mxu0 %v745
    %747 = vmatprep.subr.mxu0 0.0
    %v748 = vand.u32 %v73, 4294901760
    %749 = vmatpush1.msra.mxu0 %v748
    %750 = vmatprep.subr.mxu0 0.0
    %v751 = vand.u32 %v72, 4294901760
    %752 = vmatpush1.msra.mxu0 %v751
    %753 = vmatprep.subr.mxu0 0.0
    %v754 = vand.u32 %v71, 4294901760
    %755 = vmatpush1.msra.mxu0 %v754
    %756 = vmatprep.subr.mxu0 0.0
    %v757 = vand.u32 %v70, 4294901760
    %758 = vmatpush1.msra.mxu0 %v757
    %759 = vmatprep.subr.mxu0 0.0
    %v760 = vand.u32 %v69, 4294901760
    %761 = vmatpush1.msra.mxu0 %v760
    %762 = vmatprep.subr.mxu0 0.0
    %v763 = vand.u32 %v68, 4294901760
    %764 = vmatpush1.msra.mxu0 %v763
    %765 = vmatprep.subr.mxu0 0.0
    %v766 = vand.u32 %v67, 4294901760
    %767 = vmatpush1.msra.mxu0 %v766
    %768 = vmatprep.subr.mxu0 0.0
    %v769 = vand.u32 %v66, 4294901760
    %770 = vmatpush1.msra.mxu0 %v769
    %771 = vmatprep.subr.mxu0 0.0
    %v772 = vand.u32 %v65, 4294901760
    %773 = vmatpush1.msra.mxu0 %v772
    %774 = vmatprep.subr.mxu0 0.0
    %v775 = vand.u32 %v64, 4294901760
    %776 = vmatpush1.msra.mxu0 %v775
    %777 = vmatprep.subr.mxu0 0.0
    %v778 = vand.u32 %v63, 4294901760
    %779 = vmatpush1.msra.mxu0 %v778
    %780 = vmatprep.subr.mxu0 0.0
    %v781 = vand.u32 %v62, 4294901760
    %782 = vmatpush1.msra.mxu0 %v781
    %783 = vmatprep.subr.mxu0 0.0
    %v784 = vand.u32 %v61, 4294901760
    %785 = vmatpush1.msra.mxu0 %v784
    %786 = vmatprep.subr.mxu0 0.0
    %v787 = vand.u32 %v60, 4294901760
    %788 = vmatpush1.msra.mxu0 %v787
    %789 = vmatprep.subr.mxu0 0.0
    %790 = vmatpush2.msra.mxu0 0.0
    %791 = vmatprep.subr.mxu0 0.0
    %792 = vmatpush2.msra.mxu0 0.0
    %793 = vmatprep.subr.mxu0 0.0
    %794 = vmatpush2.msra.mxu0 0.0
    %795 = vmatprep.subr.mxu0 0.0
    %796 = vmatpush2.msra.mxu0 0.0
    %797 = vmatprep.subr.mxu0 0.0
    %798 = vmatpush2.msra.mxu0 0.0
    %799 = vmatprep.subr.mxu0 0.0
    %800 = vmatpush2.msra.mxu0 0.0
    %801 = vmatprep.subr.mxu0 0.0
    %802 = vmatpush2.msra.mxu0 0.0
    %803 = vmatprep.subr.mxu0 0.0
    %804 = vmatpush2.msra.mxu0 0.0
    %805 = vmatprep.subr.mxu0 0.0
    %806 = vmatpush2.msra.mxu0 0.0
    %807 = vmatprep.subr.mxu0 0.0
    %808 = vmatpush2.msra.mxu0 0.0
    %809 = vmatprep.subr.mxu0 0.0
    %810 = vmatpush2.msra.mxu0 0.0
    %811 = vmatprep.subr.mxu0 0.0
    %812 = vmatpush2.msra.mxu0 0.0
    %813 = vmatprep.subr.mxu0 0.0
    %814 = vmatpush2.msra.mxu0 0.0
    %815 = vmatprep.subr.mxu0 0.0
    %816 = vmatpush2.msra.mxu0 0.0
    %817 = vmatprep.subr.mxu0 0.0
    %818 = vmatpush2.msra.mxu0 0.0
    %819 = vmatprep.subr.mxu0 0.0
    %820 = vmatpush2.msra.mxu0 0.0
    %821 = vmatprep.mubr.f32.mxu0 0.0
    %v822 = vand.u32 %v54, 4294901760
    %823 = vmatmul.mubr.f32.gmra.mxu0 %v822
    %v824 = vpop.f32.mrf.mxu0
    %v825 = vadd.f32 %v720, %v824
    %v826 = vpop.f32.mrf.mxu0
    %827 = vmatprep.mubr.f32.mxu0 0.0
    %v828 = vand.u32 %v55, 4294901760
    %829 = vmatmul.mubr.f32.gmra.mxu0 %v828
    %v830 = vpop.f32.mrf.mxu0
    %v831 = vadd.f32 %v726, %v830
    %v832 = vpop.f32.mrf.mxu0
    %833 = vmatprep.mubr.f32.mxu0 0.0
    %v834 = vand.u32 %v56, 4294901760
    %835 = vmatmul.mubr.f32.gmra.mxu0 %v834
    %v836 = vpop.f32.mrf.mxu0
    %v837 = vadd.f32 %v732, %v836
    %v838 = vpop.f32.mrf.mxu0
    %839 = vmatprep.mubr.f32.mxu0 0.0
    %v840 = vand.u32 %v57, 4294901760
    %841 = vmatmul.mubr.f32.gmra.mxu0 %v840
    %v842 = vpop.f32.mrf.mxu0
    %v843 = vadd.f32 %v738, %v842
    %v844 = vpop.f32.mrf.mxu0
    %845 = vdwg.mxu0
    %v846 = vmul.f32 %v825, 0.03125
    %v847 = vmul.f32 %v831, 0.03125
    %v848 = vmul.f32 %v837, 0.03125
    %v849 = vmul.f32 %v843, 0.03125
    %v850 = vsub.f32 %v54, %v846
    %v851 = vsub.f32 %v55, %v847
    %v852 = vsub.f32 %v56, %v848
    %v853 = vsub.f32 %v57, %v849
    %v854 = vmul.f32 %v850, %v850
    %v855 = vmul.f32 %v851, %v851
    %v856 = vmul.f32 %v852, %v852
    %v857 = vmul.f32 %v853, %v853
    %858 = vmatprep.subr.mxu0 0.0
    %v859 = vand.u32 %v75, 4294901760
    %860 = vmatpush1.msra.mxu0 %v859
    %861 = vmatprep.subr.mxu0 0.0
    %v862 = vand.u32 %v74, 4294901760
    %863 = vmatpush1.msra.mxu0 %v862
    %864 = vmatprep.subr.mxu0 0.0
    %v865 = vand.u32 %v73, 4294901760
    %866 = vmatpush1.msra.mxu0 %v865
    %867 = vmatprep.subr.mxu0 0.0
    %v868 = vand.u32 %v72, 4294901760
    %869 = vmatpush1.msra.mxu0 %v868
    %870 = vmatprep.subr.mxu0 0.0
    %v871 = vand.u32 %v71, 4294901760
    %872 = vmatpush1.msra.mxu0 %v871
    %873 = vmatprep.subr.mxu0 0.0
    %v874 = vand.u32 %v70, 4294901760
    %875 = vmatpush1.msra.mxu0 %v874
    %876 = vmatprep.subr.mxu0 0.0
    %v877 = vand.u32 %v69, 4294901760
    %878 = vmatpush1.msra.mxu0 %v877
    %879 = vmatprep.subr.mxu0 0.0
    %v880 = vand.u32 %v68, 4294901760
    %881 = vmatpush1.msra.mxu0 %v880
    %882 = vmatprep.subr.mxu0 0.0
    %v883 = vand.u32 %v67, 4294901760
    %884 = vmatpush1.msra.mxu0 %v883
    %885 = vmatprep.subr.mxu0 0.0
    %v886 = vand.u32 %v66, 4294901760
    %887 = vmatpush1.msra.mxu0 %v886
    %888 = vmatprep.subr.mxu0 0.0
    %v889 = vand.u32 %v65, 4294901760
    %890 = vmatpush1.msra.mxu0 %v889
    %891 = vmatprep.subr.mxu0 0.0
    %v892 = vand.u32 %v64, 4294901760
    %893 = vmatpush1.msra.mxu0 %v892
    %894 = vmatprep.subr.mxu0 0.0
    %v895 = vand.u32 %v63, 4294901760
    %896 = vmatpush1.msra.mxu0 %v895
    %897 = vmatprep.subr.mxu0 0.0
    %v898 = vand.u32 %v62, 4294901760
    %899 = vmatpush1.msra.mxu0 %v898
    %900 = vmatprep.subr.mxu0 0.0
    %v901 = vand.u32 %v61, 4294901760
    %902 = vmatpush1.msra.mxu0 %v901
    %903 = vmatprep.subr.mxu0 0.0
    %v904 = vand.u32 %v60, 4294901760
    %905 = vmatpush1.msra.mxu0 %v904
    %906 = vmatprep.subr.mxu0 0.0
    %907 = vmatpush2.msra.mxu0 0.0
    %908 = vmatprep.subr.mxu0 0.0
    %909 = vmatpush2.msra.mxu0 0.0
    %910 = vmatprep.subr.mxu0 0.0
    %911 = vmatpush2.msra.mxu0 0.0
    %912 = vmatprep.subr.mxu0 0.0
    %913 = vmatpush2.msra.mxu0 0.0
    %914 = vmatprep.subr.mxu0 0.0
    %915 = vmatpush2.msra.mxu0 0.0
    %916 = vmatprep.subr.mxu0 0.0
    %917 = vmatpush2.msra.mxu0 0.0
    %918 = vmatprep.subr.mxu0 0.0
    %919 = vmatpush2.msra.mxu0 0.0
    %920 = vmatprep.subr.mxu0 0.0
    %921 = vmatpush2.msra.mxu0 0.0
    %922 = vmatprep.subr.mxu0 0.0
    %923 = vmatpush2.msra.mxu0 0.0
    %924 = vmatprep.subr.mxu0 0.0
    %925 = vmatpush2.msra.mxu0 0.0
    %926 = vmatprep.subr.mxu0 0.0
    %927 = vmatpush2.msra.mxu0 0.0
    %928 = vmatprep.subr.mxu0 0.0
    %929 = vmatpush2.msra.mxu0 0.0
    %930 = vmatprep.subr.mxu0 0.0
    %931 = vmatpush2.msra.mxu0 0.0
    %932 = vmatprep.subr.mxu0 0.0
    %933 = vmatpush2.msra.mxu0 0.0
    %934 = vmatprep.subr.mxu0 0.0
    %935 = vmatpush2.msra.mxu0 0.0
    %936 = vmatprep.subr.mxu0 0.0
    %937 = vmatpush2.msra.mxu0 0.0
    %938 = vmatprep.mubr.f32.mxu0 0.0
    %v939 = vand.u32 %v854, 4294901760
    %v940 = vsub.f32 %v854, %v939
    %v941 = vand.u32 %v940, 4294901760
    %v942 = vsub.f32 %v940, %v941
    %v943 = vand.u32 %v942, 4294901760
    %944 = vmatmul.mubr.f32.gmra.mxu0 %v943
    %v945 = vpop.f32.mrf.mxu0
    %v946 = vadd.f32 0.0, %v945
    %v947 = vpop.f32.mrf.mxu0
    %948 = vmatprep.mubr.f32.mxu0 0.0
    %v949 = vand.u32 %v855, 4294901760
    %v950 = vsub.f32 %v855, %v949
    %v951 = vand.u32 %v950, 4294901760
    %v952 = vsub.f32 %v950, %v951
    %v953 = vand.u32 %v952, 4294901760
    %954 = vmatmul.mubr.f32.gmra.mxu0 %v953
    %v955 = vpop.f32.mrf.mxu0
    %v956 = vadd.f32 0.0, %v955
    %v957 = vpop.f32.mrf.mxu0
    %958 = vmatprep.mubr.f32.mxu0 0.0
    %v959 = vand.u32 %v856, 4294901760
    %v960 = vsub.f32 %v856, %v959
    %v961 = vand.u32 %v960, 4294901760
    %v962 = vsub.f32 %v960, %v961
    %v963 = vand.u32 %v962, 4294901760
    %964 = vmatmul.mubr.f32.gmra.mxu0 %v963
    %v965 = vpop.f32.mrf.mxu0
    %v966 = vadd.f32 0.0, %v965
    %v967 = vpop.f32.mrf.mxu0
    %968 = vmatprep.mubr.f32.mxu0 0.0
    %v969 = vand.u32 %v857, 4294901760
    %v970 = vsub.f32 %v857, %v969
    %v971 = vand.u32 %v970, 4294901760
    %v972 = vsub.f32 %v970, %v971
    %v973 = vand.u32 %v972, 4294901760
    %974 = vmatmul.mubr.f32.gmra.mxu0 %v973
    %v975 = vpop.f32.mrf.mxu0
    %v976 = vadd.f32 0.0, %v975
    %v977 = vpop.f32.mrf.mxu0
    %978 = vdwg.mxu0
    %979 = vmatprep.subr.mxu0 0.0
    %v980 = vand.u32 %v75, 4294901760
    %v981 = vsub.f32 %v75, %v980
    %v982 = vand.u32 %v981, 4294901760
    %v983 = vsub.f32 %v981, %v982
    %v984 = vand.u32 %v983, 4294901760
    %985 = vmatpush1.msra.mxu0 %v984
    %986 = vmatprep.subr.mxu0 0.0
    %v987 = vand.u32 %v74, 4294901760
    %v988 = vsub.f32 %v74, %v987
    %v989 = vand.u32 %v988, 4294901760
    %v990 = vsub.f32 %v988, %v989
    %v991 = vand.u32 %v990, 4294901760
    %992 = vmatpush1.msra.mxu0 %v991
    %993 = vmatprep.subr.mxu0 0.0
    %v994 = vand.u32 %v73, 4294901760
    %v995 = vsub.f32 %v73, %v994
    %v996 = vand.u32 %v995, 4294901760
    %v997 = vsub.f32 %v995, %v996
    %v998 = vand.u32 %v997, 4294901760
    %999 = vmatpush1.msra.mxu0 %v998
    %1000 = vmatprep.subr.mxu0 0.0
    %v1001 = vand.u32 %v72, 4294901760
    %v1002 = vsub.f32 %v72, %v1001
    %v1003 = vand.u32 %v1002, 4294901760
    %v1004 = vsub.f32 %v1002, %v1003
    %v1005 = vand.u32 %v1004, 4294901760
    %1006 = vmatpush1.msra.mxu0 %v1005
    %1007 = vmatprep.subr.mxu0 0.0
    %v1008 = vand.u32 %v71, 4294901760
    %v1009 = vsub.f32 %v71, %v1008
    %v1010 = vand.u32 %v1009, 4294901760
    %v1011 = vsub.f32 %v1009, %v1010
    %v1012 = vand.u32 %v1011, 4294901760
    %1013 = vmatpush1.msra.mxu0 %v1012
    %1014 = vmatprep.subr.mxu0 0.0
    %v1015 = vand.u32 %v70, 4294901760
    %v1016 = vsub.f32 %v70, %v1015
    %v1017 = vand.u32 %v1016, 4294901760
    %v1018 = vsub.f32 %v1016, %v1017
    %v1019 = vand.u32 %v1018, 4294901760
    %1020 = vmatpush1.msra.mxu0 %v1019
    %1021 = vmatprep.subr.mxu0 0.0
    %v1022 = vand.u32 %v69, 4294901760
    %v1023 = vsub.f32 %v69, %v1022
    %v1024 = vand.u32 %v1023, 4294901760
    %v1025 = vsub.f32 %v1023, %v1024
    %v1026 = vand.u32 %v1025, 4294901760
    %1027 = vmatpush1.msra.mxu0 %v1026
    %1028 = vmatprep.subr.mxu0 0.0
    %v1029 = vand.u32 %v68, 4294901760
    %v1030 = vsub.f32 %v68, %v1029
    %v1031 = vand.u32 %v1030, 4294901760
    %v1032 = vsub.f32 %v1030, %v1031
    %v1033 = vand.u32 %v1032, 4294901760
    %1034 = vmatpush1.msra.mxu0 %v1033
    %1035 = vmatprep.subr.mxu0 0.0
    %v1036 = vand.u32 %v67, 4294901760
    %v1037 = vsub.f32 %v67, %v1036
    %v1038 = vand.u32 %v1037, 4294901760
    %v1039 = vsub.f32 %v1037, %v1038
    %v1040 = vand.u32 %v1039, 4294901760
    %1041 = vmatpush1.msra.mxu0 %v1040
    %1042 = vmatprep.subr.mxu0 0.0
    %v1043 = vand.u32 %v66, 4294901760
    %v1044 = vsub.f32 %v66, %v1043
    %v1045 = vand.u32 %v1044, 4294901760
    %v1046 = vsub.f32 %v1044, %v1045
    %v1047 = vand.u32 %v1046, 4294901760
    %1048 = vmatpush1.msra.mxu0 %v1047
    %1049 = vmatprep.subr.mxu0 0.0
    %v1050 = vand.u32 %v65, 4294901760
    %v1051 = vsub.f32 %v65, %v1050
    %v1052 = vand.u32 %v1051, 4294901760
    %v1053 = vsub.f32 %v1051, %v1052
    %v1054 = vand.u32 %v1053, 4294901760
    %1055 = vmatpush1.msra.mxu0 %v1054
    %1056 = vmatprep.subr.mxu0 0.0
    %v1057 = vand.u32 %v64, 4294901760
    %v1058 = vsub.f32 %v64, %v1057
    %v1059 = vand.u32 %v1058, 4294901760
    %v1060 = vsub.f32 %v1058, %v1059
    %v1061 = vand.u32 %v1060, 4294901760
    %1062 = vmatpush1.msra.mxu0 %v1061
    %1063 = vmatprep.subr.mxu0 0.0
    %v1064 = vand.u32 %v63, 4294901760
    %v1065 = vsub.f32 %v63, %v1064
    %v1066 = vand.u32 %v1065, 4294901760
    %v1067 = vsub.f32 %v1065, %v1066
    %v1068 = vand.u32 %v1067, 4294901760
    %1069 = vmatpush1.msra.mxu0 %v1068
    %1070 = vmatprep.subr.mxu0 0.0
    %v1071 = vand.u32 %v62, 4294901760
    %v1072 = vsub.f32 %v62, %v1071
    %v1073 = vand.u32 %v1072, 4294901760
    %v1074 = vsub.f32 %v1072, %v1073
    %v1075 = vand.u32 %v1074, 4294901760
    %1076 = vmatpush1.msra.mxu0 %v1075
    %1077 = vmatprep.subr.mxu0 0.0
    %v1078 = vand.u32 %v61, 4294901760
    %v1079 = vsub.f32 %v61, %v1078
    %v1080 = vand.u32 %v1079, 4294901760
    %v1081 = vsub.f32 %v1079, %v1080
    %v1082 = vand.u32 %v1081, 4294901760
    %1083 = vmatpush1.msra.mxu0 %v1082
    %1084 = vmatprep.subr.mxu0 0.0
    %v1085 = vand.u32 %v60, 4294901760
    %v1086 = vsub.f32 %v60, %v1085
    %v1087 = vand.u32 %v1086, 4294901760
    %v1088 = vsub.f32 %v1086, %v1087
    %v1089 = vand.u32 %v1088, 4294901760
    %1090 = vmatpush1.msra.mxu0 %v1089
    %1091 = vmatprep.subr.mxu0 0.0
    %1092 = vmatpush2.msra.mxu0 0.0
    %1093 = vmatprep.subr.mxu0 0.0
    %1094 = vmatpush2.msra.mxu0 0.0
    %1095 = vmatprep.subr.mxu0 0.0
    %1096 = vmatpush2.msra.mxu0 0.0
    %1097 = vmatprep.subr.mxu0 0.0
    %1098 = vmatpush2.msra.mxu0 0.0
    %1099 = vmatprep.subr.mxu0 0.0
    %1100 = vmatpush2.msra.mxu0 0.0
    %1101 = vmatprep.subr.mxu0 0.0
    %1102 = vmatpush2.msra.mxu0 0.0
    %1103 = vmatprep.subr.mxu0 0.0
    %1104 = vmatpush2.msra.mxu0 0.0
    %1105 = vmatprep.subr.mxu0 0.0
    %1106 = vmatpush2.msra.mxu0 0.0
    %1107 = vmatprep.subr.mxu0 0.0
    %1108 = vmatpush2.msra.mxu0 0.0
    %1109 = vmatprep.subr.mxu0 0.0
    %1110 = vmatpush2.msra.mxu0 0.0
    %1111 = vmatprep.subr.mxu0 0.0
    %1112 = vmatpush2.msra.mxu0 0.0
    %1113 = vmatprep.subr.mxu0 0.0
    %1114 = vmatpush2.msra.mxu0 0.0
    %1115 = vmatprep.subr.mxu0 0.0
    %1116 = vmatpush2.msra.mxu0 0.0
    %1117 = vmatprep.subr.mxu0 0.0
    %1118 = vmatpush2.msra.mxu0 0.0
    %1119 = vmatprep.subr.mxu0 0.0
    %1120 = vmatpush2.msra.mxu0 0.0
    %1121 = vmatprep.subr.mxu0 0.0
    %1122 = vmatpush2.msra.mxu0 0.0
    %1123 = vmatprep.mubr.f32.mxu0 0.0
    %v1124 = vand.u32 %v854, 4294901760
    %1125 = vmatmul.mubr.f32.gmra.mxu0 %v1124
    %v1126 = vpop.f32.mrf.mxu0
    %v1127 = vadd.f32 %v946, %v1126
    %v1128 = vpop.f32.mrf.mxu0
    %1129 = vmatprep.mubr.f32.mxu0 0.0
    %v1130 = vand.u32 %v855, 4294901760
    %1131 = vmatmul.mubr.f32.gmra.mxu0 %v1130
    %v1132 = vpop.f32.mrf.mxu0
    %v1133 = vadd.f32 %v956, %v1132
    %v1134 = vpop.f32.mrf.mxu0
    %1135 = vmatprep.mubr.f32.mxu0 0.0
    %v1136 = vand.u32 %v856, 4294901760
    %1137 = vmatmul.mubr.f32.gmra.mxu0 %v1136
    %v1138 = vpop.f32.mrf.mxu0
    %v1139 = vadd.f32 %v966, %v1138
    %v1140 = vpop.f32.mrf.mxu0
    %1141 = vmatprep.mubr.f32.mxu0 0.0
    %v1142 = vand.u32 %v857, 4294901760
    %1143 = vmatmul.mubr.f32.gmra.mxu0 %v1142
    %v1144 = vpop.f32.mrf.mxu0
    %v1145 = vadd.f32 %v976, %v1144
    %v1146 = vpop.f32.mrf.mxu0
    %1147 = vdwg.mxu0
    %1148 = vmatprep.subr.mxu0 0.0
    %v1149 = vand.u32 %v75, 4294901760
    %v1150 = vsub.f32 %v75, %v1149
    %1151 = vmatpush1.msra.mxu0 %v1150
    %1152 = vmatprep.subr.mxu0 0.0
    %v1153 = vand.u32 %v74, 4294901760
    %v1154 = vsub.f32 %v74, %v1153
    %1155 = vmatpush1.msra.mxu0 %v1154
    %1156 = vmatprep.subr.mxu0 0.0
    %v1157 = vand.u32 %v73, 4294901760
    %v1158 = vsub.f32 %v73, %v1157
    %1159 = vmatpush1.msra.mxu0 %v1158
    %1160 = vmatprep.subr.mxu0 0.0
    %v1161 = vand.u32 %v72, 4294901760
    %v1162 = vsub.f32 %v72, %v1161
    %1163 = vmatpush1.msra.mxu0 %v1162
    %1164 = vmatprep.subr.mxu0 0.0
    %v1165 = vand.u32 %v71, 4294901760
    %v1166 = vsub.f32 %v71, %v1165
    %1167 = vmatpush1.msra.mxu0 %v1166
    %1168 = vmatprep.subr.mxu0 0.0
    %v1169 = vand.u32 %v70, 4294901760
    %v1170 = vsub.f32 %v70, %v1169
    %1171 = vmatpush1.msra.mxu0 %v1170
    %1172 = vmatprep.subr.mxu0 0.0
    %v1173 = vand.u32 %v69, 4294901760
    %v1174 = vsub.f32 %v69, %v1173
    %1175 = vmatpush1.msra.mxu0 %v1174
    %1176 = vmatprep.subr.mxu0 0.0
    %v1177 = vand.u32 %v68, 4294901760
    %v1178 = vsub.f32 %v68, %v1177
    %1179 = vmatpush1.msra.mxu0 %v1178
    %1180 = vmatprep.subr.mxu0 0.0
    %v1181 = vand.u32 %v67, 4294901760
    %v1182 = vsub.f32 %v67, %v1181
    %1183 = vmatpush1.msra.mxu0 %v1182
    %1184 = vmatprep.subr.mxu0 0.0
    %v1185 = vand.u32 %v66, 4294901760
    %v1186 = vsub.f32 %v66, %v1185
    %1187 = vmatpush1.msra.mxu0 %v1186
    %1188 = vmatprep.subr.mxu0 0.0
    %v1189 = vand.u32 %v65, 4294901760
    %v1190 = vsub.f32 %v65, %v1189
    %1191 = vmatpush1.msra.mxu0 %v1190
    %1192 = vmatprep.subr.mxu0 0.0
    %v1193 = vand.u32 %v64, 4294901760
    %v1194 = vsub.f32 %v64, %v1193
    %1195 = vmatpush1.msra.mxu0 %v1194
    %1196 = vmatprep.subr.mxu0 0.0
    %v1197 = vand.u32 %v63, 4294901760
    %v1198 = vsub.f32 %v63, %v1197
    %1199 = vmatpush1.msra.mxu0 %v1198
    %1200 = vmatprep.subr.mxu0 0.0
    %v1201 = vand.u32 %v62, 4294901760
    %v1202 = vsub.f32 %v62, %v1201
    %1203 = vmatpush1.msra.mxu0 %v1202
    %1204 = vmatprep.subr.mxu0 0.0
    %v1205 = vand.u32 %v61, 4294901760
    %v1206 = vsub.f32 %v61, %v1205
    %1207 = vmatpush1.msra.mxu0 %v1206
    %1208 = vmatprep.subr.mxu0 0.0
    %v1209 = vand.u32 %v60, 4294901760
    %v1210 = vsub.f32 %v60, %v1209
    %1211 = vmatpush1.msra.mxu0 %v1210
    %1212 = vmatprep.subr.mxu0 0.0
    %1213 = vmatpush2.msra.mxu0 0.0
    %1214 = vmatprep.subr.mxu0 0.0
    %1215 = vmatpush2.msra.mxu0 0.0
    %1216 = vmatprep.subr.mxu0 0.0
    %1217 = vmatpush2.msra.mxu0 0.0
    %1218 = vmatprep.subr.mxu0 0.0
    %1219 = vmatpush2.msra.mxu0 0.0
    %1220 = vmatprep.subr.mxu0 0.0
    %1221 = vmatpush2.msra.mxu0 0.0
    %1222 = vmatprep.subr.mxu0 0.0
    %1223 = vmatpush2.msra.mxu0 0.0
    %1224 = vmatprep.subr.mxu0 0.0
    %1225 = vmatpush2.msra.mxu0 0.0
    %1226 = vmatprep.subr.mxu0 0.0
    %1227 = vmatpush2.msra.mxu0 0.0
    %1228 = vmatprep.subr.mxu0 0.0
    %1229 = vmatpush2.msra.mxu0 0.0
    %1230 = vmatprep.subr.mxu0 0.0
    %1231 = vmatpush2.msra.mxu0 0.0
    %1232 = vmatprep.subr.mxu0 0.0
    %1233 = vmatpush2.msra.mxu0 0.0
    %1234 = vmatprep.subr.mxu0 0.0
    %1235 = vmatpush2.msra.mxu0 0.0
    %1236 = vmatprep.subr.mxu0 0.0
    %1237 = vmatpush2.msra.mxu0 0.0
    %1238 = vmatprep.subr.mxu0 0.0
    %1239 = vmatpush2.msra.mxu0 0.0
    %1240 = vmatprep.subr.mxu0 0.0
    %1241 = vmatpush2.msra.mxu0 0.0
    %1242 = vmatprep.subr.mxu0 0.0
    %1243 = vmatpush2.msra.mxu0 0.0
    %1244 = vmatprep.mubr.f32.mxu0 0.0
    %v1245 = vand.u32 %v854, 4294901760
    %v1246 = vsub.f32 %v854, %v1245
    %1247 = vmatmul.mubr.f32.gmra.mxu0 %v1246
    %v1248 = vpop.f32.mrf.mxu0
    %v1249 = vadd.f32 %v1127, %v1248
    %v1250 = vpop.f32.mrf.mxu0
    %1251 = vmatprep.mubr.f32.mxu0 0.0
    %v1252 = vand.u32 %v855, 4294901760
    %v1253 = vsub.f32 %v855, %v1252
    %1254 = vmatmul.mubr.f32.gmra.mxu0 %v1253
    %v1255 = vpop.f32.mrf.mxu0
    %v1256 = vadd.f32 %v1133, %v1255
    %v1257 = vpop.f32.mrf.mxu0
    %1258 = vmatprep.mubr.f32.mxu0 0.0
    %v1259 = vand.u32 %v856, 4294901760
    %v1260 = vsub.f32 %v856, %v1259
    %1261 = vmatmul.mubr.f32.gmra.mxu0 %v1260
    %v1262 = vpop.f32.mrf.mxu0
    %v1263 = vadd.f32 %v1139, %v1262
    %v1264 = vpop.f32.mrf.mxu0
    %1265 = vmatprep.mubr.f32.mxu0 0.0
    %v1266 = vand.u32 %v857, 4294901760
    %v1267 = vsub.f32 %v857, %v1266
    %1268 = vmatmul.mubr.f32.gmra.mxu0 %v1267
    %v1269 = vpop.f32.mrf.mxu0
    %v1270 = vadd.f32 %v1145, %v1269
    %v1271 = vpop.f32.mrf.mxu0
    %1272 = vdwg.mxu0
    %1273 = vmatprep.subr.mxu0 0.0
    %v1274 = vand.u32 %v75, 4294901760
    %1275 = vmatpush1.msra.mxu0 %v1274
    %1276 = vmatprep.subr.mxu0 0.0
    %v1277 = vand.u32 %v74, 4294901760
    %1278 = vmatpush1.msra.mxu0 %v1277
    %1279 = vmatprep.subr.mxu0 0.0
    %v1280 = vand.u32 %v73, 4294901760
    %1281 = vmatpush1.msra.mxu0 %v1280
    %1282 = vmatprep.subr.mxu0 0.0
    %v1283 = vand.u32 %v72, 4294901760
    %1284 = vmatpush1.msra.mxu0 %v1283
    %1285 = vmatprep.subr.mxu0 0.0
    %v1286 = vand.u32 %v71, 4294901760
    %1287 = vmatpush1.msra.mxu0 %v1286
    %1288 = vmatprep.subr.mxu0 0.0
    %v1289 = vand.u32 %v70, 4294901760
    %1290 = vmatpush1.msra.mxu0 %v1289
    %1291 = vmatprep.subr.mxu0 0.0
    %v1292 = vand.u32 %v69, 4294901760
    %1293 = vmatpush1.msra.mxu0 %v1292
    %1294 = vmatprep.subr.mxu0 0.0
    %v1295 = vand.u32 %v68, 4294901760
    %1296 = vmatpush1.msra.mxu0 %v1295
    %1297 = vmatprep.subr.mxu0 0.0
    %v1298 = vand.u32 %v67, 4294901760
    %1299 = vmatpush1.msra.mxu0 %v1298
    %1300 = vmatprep.subr.mxu0 0.0
    %v1301 = vand.u32 %v66, 4294901760
    %1302 = vmatpush1.msra.mxu0 %v1301
    %1303 = vmatprep.subr.mxu0 0.0
    %v1304 = vand.u32 %v65, 4294901760
    %1305 = vmatpush1.msra.mxu0 %v1304
    %1306 = vmatprep.subr.mxu0 0.0
    %v1307 = vand.u32 %v64, 4294901760
    %1308 = vmatpush1.msra.mxu0 %v1307
    %1309 = vmatprep.subr.mxu0 0.0
    %v1310 = vand.u32 %v63, 4294901760
    %1311 = vmatpush1.msra.mxu0 %v1310
    %1312 = vmatprep.subr.mxu0 0.0
    %v1313 = vand.u32 %v62, 4294901760
    %1314 = vmatpush1.msra.mxu0 %v1313
    %1315 = vmatprep.subr.mxu0 0.0
    %v1316 = vand.u32 %v61, 4294901760
    %1317 = vmatpush1.msra.mxu0 %v1316
    %1318 = vmatprep.subr.mxu0 0.0
    %v1319 = vand.u32 %v60, 4294901760
    %1320 = vmatpush1.msra.mxu0 %v1319
    %1321 = vmatprep.subr.mxu0 0.0
    %1322 = vmatpush2.msra.mxu0 0.0
    %1323 = vmatprep.subr.mxu0 0.0
    %1324 = vmatpush2.msra.mxu0 0.0
    %1325 = vmatprep.subr.mxu0 0.0
    %1326 = vmatpush2.msra.mxu0 0.0
    %1327 = vmatprep.subr.mxu0 0.0
    %1328 = vmatpush2.msra.mxu0 0.0
    %1329 = vmatprep.subr.mxu0 0.0
    %1330 = vmatpush2.msra.mxu0 0.0
    %1331 = vmatprep.subr.mxu0 0.0
    %1332 = vmatpush2.msra.mxu0 0.0
    %1333 = vmatprep.subr.mxu0 0.0
    %1334 = vmatpush2.msra.mxu0 0.0
    %1335 = vmatprep.subr.mxu0 0.0
    %1336 = vmatpush2.msra.mxu0 0.0
    %1337 = vmatprep.subr.mxu0 0.0
    %1338 = vmatpush2.msra.mxu0 0.0
    %1339 = vmatprep.subr.mxu0 0.0
    %1340 = vmatpush2.msra.mxu0 0.0
    %1341 = vmatprep.subr.mxu0 0.0
    %1342 = vmatpush2.msra.mxu0 0.0
    %1343 = vmatprep.subr.mxu0 0.0
    %1344 = vmatpush2.msra.mxu0 0.0
    %1345 = vmatprep.subr.mxu0 0.0
    %1346 = vmatpush2.msra.mxu0 0.0
    %1347 = vmatprep.subr.mxu0 0.0
    %1348 = vmatpush2.msra.mxu0 0.0
    %1349 = vmatprep.subr.mxu0 0.0
    %1350 = vmatpush2.msra.mxu0 0.0
    %1351 = vmatprep.subr.mxu0 0.0
    %1352 = vmatpush2.msra.mxu0 0.0
    %1353 = vmatprep.mubr.f32.mxu0 0.0
    %v1354 = vand.u32 %v854, 4294901760
    %v1355 = vsub.f32 %v854, %v1354
    %v1356 = vand.u32 %v1355, 4294901760
    %1357 = vmatmul.mubr.f32.gmra.mxu0 %v1356
    %v1358 = vpop.f32.mrf.mxu0
    %v1359 = vadd.f32 %v1249, %v1358
    %v1360 = vpop.f32.mrf.mxu0
    %1361 = vmatprep.mubr.f32.mxu0 0.0
    %v1362 = vand.u32 %v855, 4294901760
    %v1363 = vsub.f32 %v855, %v1362
    %v1364 = vand.u32 %v1363, 4294901760
    %1365 = vmatmul.mubr.f32.gmra.mxu0 %v1364
    %v1366 = vpop.f32.mrf.mxu0
    %v1367 = vadd.f32 %v1256, %v1366
    %v1368 = vpop.f32.mrf.mxu0
    %1369 = vmatprep.mubr.f32.mxu0 0.0
    %v1370 = vand.u32 %v856, 4294901760
    %v1371 = vsub.f32 %v856, %v1370
    %v1372 = vand.u32 %v1371, 4294901760
    %1373 = vmatmul.mubr.f32.gmra.mxu0 %v1372
    %v1374 = vpop.f32.mrf.mxu0
    %v1375 = vadd.f32 %v1263, %v1374
    %v1376 = vpop.f32.mrf.mxu0
    %1377 = vmatprep.mubr.f32.mxu0 0.0
    %v1378 = vand.u32 %v857, 4294901760
    %v1379 = vsub.f32 %v857, %v1378
    %v1380 = vand.u32 %v1379, 4294901760
    %1381 = vmatmul.mubr.f32.gmra.mxu0 %v1380
    %v1382 = vpop.f32.mrf.mxu0
    %v1383 = vadd.f32 %v1270, %v1382
    %v1384 = vpop.f32.mrf.mxu0
    %1385 = vdwg.mxu0
    %1386 = vmatprep.subr.mxu0 0.0
    %v1387 = vand.u32 %v75, 4294901760
    %v1388 = vsub.f32 %v75, %v1387
    %v1389 = vand.u32 %v1388, 4294901760
    %1390 = vmatpush1.msra.mxu0 %v1389
    %1391 = vmatprep.subr.mxu0 0.0
    %v1392 = vand.u32 %v74, 4294901760
    %v1393 = vsub.f32 %v74, %v1392
    %v1394 = vand.u32 %v1393, 4294901760
    %1395 = vmatpush1.msra.mxu0 %v1394
    %1396 = vmatprep.subr.mxu0 0.0
    %v1397 = vand.u32 %v73, 4294901760
    %v1398 = vsub.f32 %v73, %v1397
    %v1399 = vand.u32 %v1398, 4294901760
    %1400 = vmatpush1.msra.mxu0 %v1399
    %1401 = vmatprep.subr.mxu0 0.0
    %v1402 = vand.u32 %v72, 4294901760
    %v1403 = vsub.f32 %v72, %v1402
    %v1404 = vand.u32 %v1403, 4294901760
    %1405 = vmatpush1.msra.mxu0 %v1404
    %1406 = vmatprep.subr.mxu0 0.0
    %v1407 = vand.u32 %v71, 4294901760
    %v1408 = vsub.f32 %v71, %v1407
    %v1409 = vand.u32 %v1408, 4294901760
    %1410 = vmatpush1.msra.mxu0 %v1409
    %1411 = vmatprep.subr.mxu0 0.0
    %v1412 = vand.u32 %v70, 4294901760
    %v1413 = vsub.f32 %v70, %v1412
    %v1414 = vand.u32 %v1413, 4294901760
    %1415 = vmatpush1.msra.mxu0 %v1414
    %1416 = vmatprep.subr.mxu0 0.0
    %v1417 = vand.u32 %v69, 4294901760
    %v1418 = vsub.f32 %v69, %v1417
    %v1419 = vand.u32 %v1418, 4294901760
    %1420 = vmatpush1.msra.mxu0 %v1419
    %1421 = vmatprep.subr.mxu0 0.0
    %v1422 = vand.u32 %v68, 4294901760
    %v1423 = vsub.f32 %v68, %v1422
    %v1424 = vand.u32 %v1423, 4294901760
    %1425 = vmatpush1.msra.mxu0 %v1424
    %1426 = vmatprep.subr.mxu0 0.0
    %v1427 = vand.u32 %v67, 4294901760
    %v1428 = vsub.f32 %v67, %v1427
    %v1429 = vand.u32 %v1428, 4294901760
    %1430 = vmatpush1.msra.mxu0 %v1429
    %1431 = vmatprep.subr.mxu0 0.0
    %v1432 = vand.u32 %v66, 4294901760
    %v1433 = vsub.f32 %v66, %v1432
    %v1434 = vand.u32 %v1433, 4294901760
    %1435 = vmatpush1.msra.mxu0 %v1434
    %1436 = vmatprep.subr.mxu0 0.0
    %v1437 = vand.u32 %v65, 4294901760
    %v1438 = vsub.f32 %v65, %v1437
    %v1439 = vand.u32 %v1438, 4294901760
    %1440 = vmatpush1.msra.mxu0 %v1439
    %1441 = vmatprep.subr.mxu0 0.0
    %v1442 = vand.u32 %v64, 4294901760
    %v1443 = vsub.f32 %v64, %v1442
    %v1444 = vand.u32 %v1443, 4294901760
    %1445 = vmatpush1.msra.mxu0 %v1444
    %1446 = vmatprep.subr.mxu0 0.0
    %v1447 = vand.u32 %v63, 4294901760
    %v1448 = vsub.f32 %v63, %v1447
    %v1449 = vand.u32 %v1448, 4294901760
    %1450 = vmatpush1.msra.mxu0 %v1449
    %1451 = vmatprep.subr.mxu0 0.0
    %v1452 = vand.u32 %v62, 4294901760
    %v1453 = vsub.f32 %v62, %v1452
    %v1454 = vand.u32 %v1453, 4294901760
    %1455 = vmatpush1.msra.mxu0 %v1454
    %1456 = vmatprep.subr.mxu0 0.0
    %v1457 = vand.u32 %v61, 4294901760
    %v1458 = vsub.f32 %v61, %v1457
    %v1459 = vand.u32 %v1458, 4294901760
    %1460 = vmatpush1.msra.mxu0 %v1459
    %1461 = vmatprep.subr.mxu0 0.0
    %v1462 = vand.u32 %v60, 4294901760
    %v1463 = vsub.f32 %v60, %v1462
    %v1464 = vand.u32 %v1463, 4294901760
    %1465 = vmatpush1.msra.mxu0 %v1464
    %1466 = vmatprep.subr.mxu0 0.0
    %1467 = vmatpush2.msra.mxu0 0.0
    %1468 = vmatprep.subr.mxu0 0.0
    %1469 = vmatpush2.msra.mxu0 0.0
    %1470 = vmatprep.subr.mxu0 0.0
    %1471 = vmatpush2.msra.mxu0 0.0
    %1472 = vmatprep.subr.mxu0 0.0
    %1473 = vmatpush2.msra.mxu0 0.0
    %1474 = vmatprep.subr.mxu0 0.0
    %1475 = vmatpush2.msra.mxu0 0.0
    %1476 = vmatprep.subr.mxu0 0.0
    %1477 = vmatpush2.msra.mxu0 0.0
    %1478 = vmatprep.subr.mxu0 0.0
    %1479 = vmatpush2.msra.mxu0 0.0
    %1480 = vmatprep.subr.mxu0 0.0
    %1481 = vmatpush2.msra.mxu0 0.0
    %1482 = vmatprep.subr.mxu0 0.0
    %1483 = vmatpush2.msra.mxu0 0.0
    %1484 = vmatprep.subr.mxu0 0.0
    %1485 = vmatpush2.msra.mxu0 0.0
    %1486 = vmatprep.subr.mxu0 0.0
    %1487 = vmatpush2.msra.mxu0 0.0
    %1488 = vmatprep.subr.mxu0 0.0
    %1489 = vmatpush2.msra.mxu0 0.0
    %1490 = vmatprep.subr.mxu0 0.0
    %1491 = vmatpush2.msra.mxu0 0.0
    %1492 = vmatprep.subr.mxu0 0.0
    %1493 = vmatpush2.msra.mxu0 0.0
    %1494 = vmatprep.subr.mxu0 0.0
    %1495 = vmatpush2.msra.mxu0 0.0
    %1496 = vmatprep.subr.mxu0 0.0
    %1497 = vmatpush2.msra.mxu0 0.0
    %1498 = vmatprep.mubr.f32.mxu0 0.0
    %v1499 = vand.u32 %v854, 4294901760
    %1500 = vmatmul.mubr.f32.gmra.mxu0 %v1499
    %v1501 = vpop.f32.mrf.mxu0
    %v1502 = vadd.f32 %v1359, %v1501
    %v1503 = vpop.f32.mrf.mxu0
    %1504 = vmatprep.mubr.f32.mxu0 0.0
    %v1505 = vand.u32 %v855, 4294901760
    %1506 = vmatmul.mubr.f32.gmra.mxu0 %v1505
    %v1507 = vpop.f32.mrf.mxu0
    %v1508 = vadd.f32 %v1367, %v1507
    %v1509 = vpop.f32.mrf.mxu0
    %1510 = vmatprep.mubr.f32.mxu0 0.0
    %v1511 = vand.u32 %v856, 4294901760
    %1512 = vmatmul.mubr.f32.gmra.mxu0 %v1511
    %v1513 = vpop.f32.mrf.mxu0
    %v1514 = vadd.f32 %v1375, %v1513
    %v1515 = vpop.f32.mrf.mxu0
    %1516 = vmatprep.mubr.f32.mxu0 0.0
    %v1517 = vand.u32 %v857, 4294901760
    %1518 = vmatmul.mubr.f32.gmra.mxu0 %v1517
    %v1519 = vpop.f32.mrf.mxu0
    %v1520 = vadd.f32 %v1383, %v1519
    %v1521 = vpop.f32.mrf.mxu0
    %1522 = vdwg.mxu0
    %1523 = vmatprep.subr.mxu0 0.0
    %v1524 = vand.u32 %v75, 4294901760
    %1525 = vmatpush1.msra.mxu0 %v1524
    %1526 = vmatprep.subr.mxu0 0.0
    %v1527 = vand.u32 %v74, 4294901760
    %1528 = vmatpush1.msra.mxu0 %v1527
    %1529 = vmatprep.subr.mxu0 0.0
    %v1530 = vand.u32 %v73, 4294901760
    %1531 = vmatpush1.msra.mxu0 %v1530
    %1532 = vmatprep.subr.mxu0 0.0
    %v1533 = vand.u32 %v72, 4294901760
    %1534 = vmatpush1.msra.mxu0 %v1533
    %1535 = vmatprep.subr.mxu0 0.0
    %v1536 = vand.u32 %v71, 4294901760
    %1537 = vmatpush1.msra.mxu0 %v1536
    %1538 = vmatprep.subr.mxu0 0.0
    %v1539 = vand.u32 %v70, 4294901760
    %1540 = vmatpush1.msra.mxu0 %v1539
    %1541 = vmatprep.subr.mxu0 0.0
    %v1542 = vand.u32 %v69, 4294901760
    %1543 = vmatpush1.msra.mxu0 %v1542
    %1544 = vmatprep.subr.mxu0 0.0
    %v1545 = vand.u32 %v68, 4294901760
    %1546 = vmatpush1.msra.mxu0 %v1545
    %1547 = vmatprep.subr.mxu0 0.0
    %v1548 = vand.u32 %v67, 4294901760
    %1549 = vmatpush1.msra.mxu0 %v1548
    %1550 = vmatprep.subr.mxu0 0.0
    %v1551 = vand.u32 %v66, 4294901760
    %1552 = vmatpush1.msra.mxu0 %v1551
    %1553 = vmatprep.subr.mxu0 0.0
    %v1554 = vand.u32 %v65, 4294901760
    %1555 = vmatpush1.msra.mxu0 %v1554
    %1556 = vmatprep.subr.mxu0 0.0
    %v1557 = vand.u32 %v64, 4294901760
    %1558 = vmatpush1.msra.mxu0 %v1557
    %1559 = vmatprep.subr.mxu0 0.0
    %v1560 = vand.u32 %v63, 4294901760
    %1561 = vmatpush1.msra.mxu0 %v1560
    %1562 = vmatprep.subr.mxu0 0.0
    %v1563 = vand.u32 %v62, 4294901760
    %1564 = vmatpush1.msra.mxu0 %v1563
    %1565 = vmatprep.subr.mxu0 0.0
    %v1566 = vand.u32 %v61, 4294901760
    %1567 = vmatpush1.msra.mxu0 %v1566
    %1568 = vmatprep.subr.mxu0 0.0
    %v1569 = vand.u32 %v60, 4294901760
    %1570 = vmatpush1.msra.mxu0 %v1569
    %1571 = vmatprep.subr.mxu0 0.0
    %1572 = vmatpush2.msra.mxu0 0.0
    %1573 = vmatprep.subr.mxu0 0.0
    %1574 = vmatpush2.msra.mxu0 0.0
    %1575 = vmatprep.subr.mxu0 0.0
    %1576 = vmatpush2.msra.mxu0 0.0
    %1577 = vmatprep.subr.mxu0 0.0
    %1578 = vmatpush2.msra.mxu0 0.0
    %1579 = vmatprep.subr.mxu0 0.0
    %1580 = vmatpush2.msra.mxu0 0.0
    %1581 = vmatprep.subr.mxu0 0.0
    %1582 = vmatpush2.msra.mxu0 0.0
    %1583 = vmatprep.subr.mxu0 0.0
    %1584 = vmatpush2.msra.mxu0 0.0
    %1585 = vmatprep.subr.mxu0 0.0
    %1586 = vmatpush2.msra.mxu0 0.0
    %1587 = vmatprep.subr.mxu0 0.0
    %1588 = vmatpush2.msra.mxu0 0.0
    %1589 = vmatprep.subr.mxu0 0.0
    %1590 = vmatpush2.msra.mxu0 0.0
    %1591 = vmatprep.subr.mxu0 0.0
    %1592 = vmatpush2.msra.mxu0 0.0
    %1593 = vmatprep.subr.mxu0 0.0
    %1594 = vmatpush2.msra.mxu0 0.0
    %1595 = vmatprep.subr.mxu0 0.0
    %1596 = vmatpush2.msra.mxu0 0.0
    %1597 = vmatprep.subr.mxu0 0.0
    %1598 = vmatpush2.msra.mxu0 0.0
    %1599 = vmatprep.subr.mxu0 0.0
    %1600 = vmatpush2.msra.mxu0 0.0
    %1601 = vmatprep.subr.mxu0 0.0
    %1602 = vmatpush2.msra.mxu0 0.0
    %1603 = vmatprep.mubr.f32.mxu0 0.0
    %v1604 = vand.u32 %v854, 4294901760
    %1605 = vmatmul.mubr.f32.gmra.mxu0 %v1604
    %v1606 = vpop.f32.mrf.mxu0
    %v1607 = vadd.f32 %v1502, %v1606
    %v1608 = vpop.f32.mrf.mxu0
    %1609 = vmatprep.mubr.f32.mxu0 0.0
    %v1610 = vand.u32 %v855, 4294901760
    %1611 = vmatmul.mubr.f32.gmra.mxu0 %v1610
    %v1612 = vpop.f32.mrf.mxu0
    %v1613 = vadd.f32 %v1508, %v1612
    %v1614 = vpop.f32.mrf.mxu0
    %1615 = vmatprep.mubr.f32.mxu0 0.0
    %v1616 = vand.u32 %v856, 4294901760
    %1617 = vmatmul.mubr.f32.gmra.mxu0 %v1616
    %v1618 = vpop.f32.mrf.mxu0
    %v1619 = vadd.f32 %v1514, %v1618
    %v1620 = vpop.f32.mrf.mxu0
    %1621 = vmatprep.mubr.f32.mxu0 0.0
    %v1622 = vand.u32 %v857, 4294901760
    %1623 = vmatmul.mubr.f32.gmra.mxu0 %v1622
    %v1624 = vpop.f32.mrf.mxu0
    %v1625 = vadd.f32 %v1520, %v1624
    %v1626 = vpop.f32.mrf.mxu0
    %1627 = vdwg.mxu0
    %v1628 = vmul.f32 %v1607, 0.03125
    %v1629 = vmul.f32 %v1613, 0.03125
    %v1630 = vmul.f32 %v1619, 0.03125
    %v1631 = vmul.f32 %v1625, 0.03125
    %v1632 = vadd.f32 %v1628, 1e-05
    %v1633 = vadd.f32 %v1629, 1e-05
    %v1634 = vadd.f32 %v1630, 1e-05
    %v1635 = vadd.f32 %v1631, 1e-05
    %v1636 = vrsqrt.pop %v1632
    %v1637 = vrsqrt.pop %v1633
    %v1638 = vrsqrt.pop %v1634
    %v1639 = vrsqrt.pop %v1635
    %v1640 = vlaneseq
    %v1641 = vshrl.u32 %v1640, 7
    %v1642 = vsub.s32 0, %v1641
    %v1643 = vrot.slane %v58, %v1642
    %v1644 = vmul.f32 %v1636, %v1643
    %v1645 = vmul.f32 %v1637, %v1643
    %v1646 = vmul.f32 %v1638, %v1643
    %v1647 = vmul.f32 %v1639, %v1643
    %v1648 = vmul.f32 %v850, %v1644
    %v1649 = vmul.f32 %v851, %v1645
    %v1650 = vmul.f32 %v852, %v1646
    %v1651 = vmul.f32 %v853, %v1647
    %v1652 = vlaneseq
    %v1653 = vshrl.u32 %v1652, 7
    %v1654 = vsub.s32 0, %v1653
    %v1655 = vrot.slane %v59, %v1654
    %v1656 = vadd.f32 %v1648, %v1655
    %v1657 = vadd.f32 %v1649, %v1655
    %v1658 = vadd.f32 %v1650, %v1655
    %v1659 = vadd.f32 %v1651, %v1655
    %1660 = vst [vmem:[#allocation8] sm:$0xff] %v1656
    %1661 = vst [vmem:[#allocation8 + $0x8] sm:$0xff] %v1657
    %1662 = vst [vmem:[#allocation8 + $0x10] sm:$0xff] %v1658
    %1663 = vst [vmem:[#allocation8 + $0x18] sm:$0xff] %v1659
    // Predicated region
    $region26: #{tpu_custom_call.1} parent=1 // pred_check
      _
    $region27: #{tpu_custom_call.1} parent=1 // pred_check_branch
      %1665 = sbr.rel (0) target = $region29
    $region28: #{tpu_custom_call.1} parent=1 // pred_region
      %s1667 = ssub.s32 512, 512
      %1668 = vsyncadd [#allocation4], %s1667
      %s1669 = sshll.u32 [#allocation8], 4
      %s1670 = int_to_ptr.vmem [resolvable:$true] %s1669
      %1675 = dma.vmem_to_hbm [thread:$0]  %s1670, 512, %s3, [#allocation4], 128, 128, 8
    $region29: #{tpu_custom_call.1} parent=1 // pred_fallthru
      _
    // Predicated region
    $region30: #{tpu_custom_call.1} parent=1 // pred_check
      _
    $region31: #{tpu_custom_call.1} parent=1 // pred_check_branch
      %1677 = sbr.rel (0) target = $region33
    $region32: #{tpu_custom_call.1} parent=1 // pred_region
      %1678 = dma.done [#allocation4], 512
    $region33: #{tpu_custom_call.1} parent=1 // pred_fallthru
      _
    %1679 = vsyncpa [#allocation3], 1
    %1680 = vsyncpa [#allocation6], 1
    %1681 = vsyncpa [#allocation4], 1

</llo_original>
